<compile_context>
chip_gen: v7x
topology: tpu7x:2x2x1
jax: 0.10.0
libtpu: 0.0.40
codegen_flags: <defaults>
</compile_context>

<pallas_src>
import functools

import jax
import jax.numpy as jnp
from jax.experimental import pallas as pl
from jax.experimental.pallas import tpu as pltpu

EPS = 1e-5  # PyTorch BatchNorm default eps


# ----------------------------------------------------------------------------
# Single fused Pallas kernel: the whole generator forward
# ----------------------------------------------------------------------------
def _dcgen_kernel(offsets, z_ref, w1_ref, w2_ref, m1_ref, m2_ref,
                  r_ref, bmat_ref, v_ref, o_ref):
    (b1_o, g1_o, be1_o, b2_o, g2_o, be2_o,
     bb1_o, g3_o, be3_o, bb2_o) = offsets

    def seg(o):
        off, width = o
        return v_ref[:, off:off + width]          # (1, width), 128-aligned offset

    def bdot(x, w_ref):
        # bf16 operands on the MXU, f32 accumulation.
        return jnp.dot(x.astype(jnp.bfloat16), w_ref[...],
                       preferred_element_type=jnp.float32)

    def bn_cols(y, g, be):
        # BatchNorm1d, training mode: per-column batch stats, biased variance.
        mean = jnp.mean(y, axis=0, keepdims=True)
        var = jnp.mean((y - mean) ** 2, axis=0, keepdims=True)
        return g * (y - mean) * jax.lax.rsqrt(var + EPS) + be

    def ch_avg(row):
        # (1, C*HW) column stats -> per-channel average -> broadcast back to
        # (1, C*HW) via the factored bf16 reduce (R) / broadcast (B) matrices.
        ch = jnp.dot(row.astype(jnp.bfloat16), r_ref[...],
                     preferred_element_type=jnp.float32)
        return jnp.dot(ch.astype(jnp.bfloat16), bmat_ref[...],
                       preferred_element_type=jnp.float32)

    # fc1 -> relu -> bn1
    h = jnp.maximum(bdot(z_ref[...], w1_ref) + seg(b1_o), 0.0)
    h = bn_cols(h, seg(g1_o), seg(be1_o))
    # fc2 -> relu -> bn2
    h = jnp.maximum(bdot(h, w2_ref) + seg(b2_o), 0.0)
    h = bn_cols(h, seg(g2_o), seg(be2_o))
    # deconv1 (dense linear map over NCHW-flattened features) -> relu
    h = jnp.maximum(bdot(h, m1_ref) + seg(bb1_o), 0.0)
    # bn3 = BatchNorm2d, training mode: per-channel stats over N*H*W, with the
    # two-pass variance E[(x - ch_mean)^2].
    mean_b = ch_avg(jnp.mean(h, axis=0, keepdims=True))
    d = h - mean_b
    var_b = ch_avg(jnp.mean(d * d, axis=0, keepdims=True))
    h = seg(g3_o) * d * jax.lax.rsqrt(var_b + EPS) + seg(be3_o)
    # deconv2 -> tanh   (output is lane-dense: img_dim*img_dim columns)
    o_ref[...] = jnp.tanh(bdot(h, m2_ref) + seg(bb2_o))


def _full_spec(shape):
    # Whole array as a single block (grid has one step).
    return pl.BlockSpec(shape, lambda i: (0,) * len(shape))


def _dcgen_forward(z, params, offsets, out_hw):
    w1, w2, m1, m2, r, bmat, vecs = params
    args = (z, w1, w2, m1, m2, r, bmat, vecs)
    N = z.shape[0]
    ocols = m2.shape[1]

    flops = 2 * N * (w1.shape[0] * w1.shape[1] + w2.shape[0] * w2.shape[1]
                     + m1.shape[0] * m1.shape[1] + m2.shape[0] * m2.shape[1])
    flops += 4 * (int(r.size) + int(bmat.size))       # 2x (reduce + broadcast)
    bytes_accessed = sum(int(a.size) * a.dtype.itemsize for a in args)
    bytes_accessed += N * ocols * 4
    transcendentals = N * ocols + 2 * m1.shape[1]     # tanh + rsqrt (approx)

    out = pl.pallas_call(
        functools.partial(_dcgen_kernel, offsets),
        grid=(1,),
        in_specs=[_full_spec(a.shape) for a in args],
        out_specs=_full_spec((N, ocols)),
        out_shape=jax.ShapeDtypeStruct((N, ocols), jnp.float32),
        # grid=(1,): nothing to pipeline, so the default buffering is accepted;
        # the duplicated resident parameter buffer is negligible at these sizes.
        compiler_params=pltpu.CompilerParams(dimension_semantics=("arbitrary",)),
        cost_estimate=pl.CostEstimate(flops=flops,
                                      transcendentals=transcendentals,
                                      bytes_accessed=bytes_accessed),
    )(*args)
    # NCHW output (Co = 1), same layout as the PyTorch module.
    return out.reshape(N, 1, out_hw, out_hw)


# ----------------------------------------------------------------------------
# One-time (init) lowering of ConvTranspose2d to dense matmul matrices.
# Pure parameter preprocessing, runs once in plain XLA at construction time.
# ----------------------------------------------------------------------------
def _conv_transpose_nchw(x, w_pt, stride, padding):
    # x: (N, Ci, H, W), w_pt: (Ci, Co, k, k) in PyTorch layout -> (N, Co, Ho, Wo).
    # ConvTranspose2d(stride, padding) == stride-1 conv over the zero-dilated,
    # zero-padded (pad = k-1-padding) input with the flipped kernel.
    N, Ci, H, W = x.shape
    k = w_pt.shape[2]
    xh = x.transpose(0, 2, 3, 1)                                   # NHWC
    Hd, Wd = (H - 1) * stride + 1, (W - 1) * stride + 1
    xd = jnp.zeros((N, Hd, Wd, Ci), x.dtype).at[:, ::stride, ::stride, :].set(xh)
    q = k - 1 - padding
    xp = jnp.pad(xd, ((0, 0), (q, q), (q, q), (0, 0)))
    Ho, Wo = Hd + 2 * q - k + 1, Wd + 2 * q - k + 1
    wc = jnp.flip(w_pt, axis=(2, 3)).transpose(2, 3, 0, 1).reshape(k * k * Ci, -1)
    cols = jnp.stack([xp[:, ky:ky + Ho, kx:kx + Wo, :]
                      for ky in range(k) for kx in range(k)], axis=3)
    cols = cols.reshape(N * Ho * Wo, k * k * Ci)
    y = (cols @ wc).reshape(N, Ho, Wo, -1).transpose(0, 3, 1, 2)   # NCHW
    return y


def _deconv_as_dense(w_pt, in_w, stride, padding):
    # Dense M of shape (Ci*in_w*in_w, Co*out_w*out_w) such that, for NCHW
    # flattening, ConvTranspose2d(x).reshape(N, -1) == x.reshape(N, -1) @ M.
    Ci = w_pt.shape[0]
    n_in = Ci * in_w * in_w
    basis = jnp.eye(n_in, dtype=jnp.float32).reshape(n_in, Ci, in_w, in_w)
    y = _conv_transpose_nchw(basis, w_pt, stride, padding)         # (n_in, Co, ow, ow)
    out_w = y.shape[-1]
    return y.reshape(n_in, -1), out_w


def _pack_rows(vectors):
    # Concatenate 1-D f32 vectors into ONE lane-dense (1, P) array, each vector
    # starting at a 128-aligned lane offset.  Returns (packed, ((off, width),...)).
    chunks, offsets, cursor = [], [], 0
    for v in vectors:
        v = jnp.asarray(v, jnp.float32).reshape(-1)
        width = int(v.shape[0])
        pad = (-width) % 128
        chunks.append(jnp.pad(v, (0, pad)))
        offsets.append((cursor, width))
        cursor += width + pad
    return jnp.concatenate(chunks).reshape(1, -1), tuple(offsets)


# ----------------------------------------------------------------------------
# Pure-JAX f32 reference (used only for the loose correctness check in main)
# ----------------------------------------------------------------------------
def _reference_forward(z, raw, num_conv1, conv1_in_w):
    (w1, b1, g1, be1, w2, b2, g2, be2, wd1, bd1, g3, be3, wd2, bd2) = raw

    def bn(y, g, be, axes):
        mean = jnp.mean(y, axis=axes, keepdims=True)
        var = jnp.mean((y - mean) ** 2, axis=axes, keepdims=True)
        return g * (y - mean) * jax.lax.rsqrt(var + EPS) + be

    x = jnp.maximum(z @ w1 + b1, 0.0)
    x = bn(x, g1[None, :], be1[None, :], (0,))
    x = jnp.maximum(x @ w2 + b2, 0.0)
    x = bn(x, g2[None, :], be2[None, :], (0,))
    x = x.reshape(-1, num_conv1, conv1_in_w, conv1_in_w)
    x = jnp.maximum(_conv_transpose_nchw(x, wd1, 2, 1)
                    + bd1[None, :, None, None], 0.0)
    x = bn(x, g3[None, :, None, None], be3[None, :, None, None], (0, 2, 3))
    x = _conv_transpose_nchw(x, wd2, 2, 1) + bd2[None, :, None, None]
    return jnp.tanh(x)


# ----------------------------------------------------------------------------
# Model
# ----------------------------------------------------------------------------
class DCGeneratorPallas:
    def __init__(self, noise_dim, hidden_dim, num_conv1, size_conv1,
                 num_conv2, size_conv2, img_dim, key):
        conv2_in_w = 1 + (img_dim - size_conv2 + 2) // 2
        conv1_in_w = 1 + (conv2_in_w - size_conv1 + 2) // 2
        fc2_in = conv1_in_w * conv1_in_w * num_conv1

        ks = jax.random.split(key, 6)
        s = 0.05
        # Linear weights stored as (in, out) for x @ w.
        w1 = s * jax.random.normal(ks[0], (noise_dim, hidden_dim), jnp.float32)
        b1 = s * jax.random.normal(ks[1], (hidden_dim,), jnp.float32)
        w2 = s * jax.random.normal(ks[2], (hidden_dim, fc2_in), jnp.float32)
        b2 = s * jax.random.normal(ks[3], (fc2_in,), jnp.float32)
        # ConvTranspose2d weights in PyTorch layout (Ci, Co, kH, kW).
        wd1 = s * jax.random.normal(
            ks[4], (num_conv1, num_conv2, size_conv1, size_conv1), jnp.float32)
        bd1 = jnp.zeros((num_conv2,), jnp.float32)
        wd2 = s * jax.random.normal(
            ks[5], (num_conv2, 1, size_conv2, size_conv2), jnp.float32)
        bd2 = jnp.zeros((1,), jnp.float32)
        # BatchNorm affine params (PyTorch default: weight=1, bias=0).
        g1, be1 = jnp.ones((hidden_dim,), jnp.float32), jnp.zeros((hidden_dim,), jnp.float32)
        g2, be2 = jnp.ones((fc2_in,), jnp.float32), jnp.zeros((fc2_in,), jnp.float32)
        g3, be3 = jnp.ones((num_conv2,), jnp.float32), jnp.zeros((num_conv2,), jnp.float32)

        # Raw f32 params kept for the pure-JAX reference check.
        self.raw_params = (w1, b1, g1, be1, w2, b2, g2, be2,
                           wd1, bd1, g3, be3, wd2, bd2)
        self.conv1_in_w = conv1_in_w
        self.num_conv1 = num_conv1

        # ---- one-time parameter preprocessing (hoisted out of the forward) --
        m1, hw1 = _deconv_as_dense(wd1, conv1_in_w, 2, 1)   # (fc2_in, C2*hw1^2)
        m2, hw2 = _deconv_as_dense(wd2, hw1, 2, 1)          # (C2*hw1^2, 1*hw2^2)
        hw1sq = hw1 * hw1
        bb1 = jnp.repeat(bd1, hw1sq)                        # per-column deconv1 bias
        bb2 = jnp.repeat(bd2, hw2 * hw2)                    # per-column deconv2 bias
        g3c = jnp.repeat(g3, hw1sq)                         # bn3 gamma per column
        be3c = jnp.repeat(be3, hw1sq)                       # bn3 beta  per column
        # Factored bn3 channel reduce / broadcast matrices (replace dense P):
        # R (C*HW, C) entries 1/HW, B (C, C*HW) entries 0/1, both exact in bf16.
        r = jnp.kron(jnp.eye(num_conv2, dtype=jnp.float32),
                     jnp.ones((hw1sq, 1), jnp.float32) / float(hw1sq)
                     ).astype(jnp.bfloat16)
        bmat = jnp.kron(jnp.eye(num_conv2, dtype=jnp.float32),
                        jnp.ones((1, hw1sq), jnp.float32)).astype(jnp.bfloat16)
        # Pack all per-column row vectors into ONE lane-dense f32 array.
        vecs, offsets = _pack_rows(
            [b1, g1, be1, b2, g2, be2, bb1, g3c, be3c, bb2])

        # NOTE: weights stored bf16 for the MXU -> ~1e-2-level relative
        # deviation from an f32 PyTorch reference is expected.
        params = (w1.astype(jnp.bfloat16), w2.astype(jnp.bfloat16),
                  m1.astype(jnp.bfloat16), m2.astype(jnp.bfloat16),
                  r, bmat, vecs)
        out_hw = hw2
        # Whole forward jitted: one pallas_call + final reshape, no eager glue.
        self._forward = jax.jit(
            lambda z: _dcgen_forward(z, params, offsets, out_hw))

    def __call__(self, z):
        return self._forward(z)


if __name__ == "__main__":
    noise_dim, hidden_dim = 16, 32
    num_conv1, size_conv1 = 8, 4
    num_conv2, size_conv2 = 8, 4
    img_dim = 16
    batch = 4

    key = jax.random.PRNGKey(0)
    kp, kz = jax.random.split(key)
    model = DCGeneratorPallas(noise_dim, hidden_dim, num_conv1, size_conv1,
                              num_conv2, size_conv2, img_dim, kp)
    z = jax.random.normal(kz, (batch, noise_dim), jnp.float32)

    out = jax.block_until_ready(model(z))
    assert out.shape == (batch, 1, img_dim, img_dim), out.shape
    assert bool(jnp.all(jnp.isfinite(out)))

    # Loose numerical check against a pure-JAX f32 reference (kernel matmuls
    # use bf16 operands, so allow bf16-level deviation).
    ref = _reference_forward(z, model.raw_params, model.num_conv1,
                             model.conv1_in_w)
    max_diff = float(jnp.max(jnp.abs(out - ref)))
    assert max_diff < 0.1, f"max |kernel - ref| = {max_diff}"
    print("KERNEL_OK")
</pallas_src>

<mosaic_0001>
module attributes {stable_mosaic.version = 11 : i64} {
  func.func @_dcgen_kernel(%arg0: i32, %arg1: memref<4x16xf32, #tpu.memory_space<vmem>>, %arg2: memref<16x32xbf16, #tpu.memory_space<vmem>>, %arg3: memref<32x128xbf16, #tpu.memory_space<vmem>>, %arg4: memref<128x512xbf16, #tpu.memory_space<vmem>>, %arg5: memref<512x256xbf16, #tpu.memory_space<vmem>>, %arg6: memref<512x8xbf16, #tpu.memory_space<vmem>>, %arg7: memref<8x512xbf16, #tpu.memory_space<vmem>>, %arg8: memref<1x2560xf32, #tpu.memory_space<vmem>>, %arg9: memref<4x256xf32, #tpu.memory_space<vmem>>) attributes {dimension_semantics = [#tpu.dimension_semantics<arbitrary>], iteration_bounds = array<i64: 1>, scalar_prefetch = 0 : i64, scratch_operands = 0 : i64, tpu.core_type = #tpu.core_type<tc>, window_params = [{pipeline_mode = #tpu.pipeline_mode<synchronous>, transform_indices = @transform_0, window_bounds = array<i64: 4, 16>}, {pipeline_mode = #tpu.pipeline_mode<synchronous>, transform_indices = @transform_1, window_bounds = array<i64: 16, 32>}, {pipeline_mode = #tpu.pipeline_mode<synchronous>, transform_indices = @transform_2, window_bounds = array<i64: 32, 128>}, {pipeline_mode = #tpu.pipeline_mode<synchronous>, transform_indices = @transform_3, window_bounds = array<i64: 128, 512>}, {pipeline_mode = #tpu.pipeline_mode<synchronous>, transform_indices = @transform_4, window_bounds = array<i64: 512, 256>}, {pipeline_mode = #tpu.pipeline_mode<synchronous>, transform_indices = @transform_5, window_bounds = array<i64: 512, 8>}, {pipeline_mode = #tpu.pipeline_mode<synchronous>, transform_indices = @transform_6, window_bounds = array<i64: 8, 512>}, {pipeline_mode = #tpu.pipeline_mode<synchronous>, transform_indices = @transform_7, window_bounds = array<i64: 1, 2560>}, {pipeline_mode = #tpu.pipeline_mode<synchronous>, transform_indices = @transform_8, window_bounds = array<i64: 4, 256>}]} {
    %c0 = arith.constant 0 : index
    %c0_0 = arith.constant 0 : index
    %0 = vector.load %arg1[%c0, %c0_0] : memref<4x16xf32, #tpu.memory_space<vmem>>, vector<4x16xf32>
    %1 = arith.truncf %0 : vector<4x16xf32> to vector<4x16xbf16>
    %c0_1 = arith.constant 0 : index
    %c0_2 = arith.constant 0 : index
    %2 = vector.load %arg2[%c0_1, %c0_2] : memref<16x32xbf16, #tpu.memory_space<vmem>>, vector<16x32xbf16>
    %cst = arith.constant dense<0.000000e+00> : vector<4x32xf32>
    %3 = tpu.matmul %1, %2, %cst {dimension_numbers = #tpu.dot_dimension_numbers<[1], [0], [0], [1], [0, 0, 1, 1], [], []>} : vector<4x16xbf16>, vector<16x32xbf16>, vector<4x32xf32> -> vector<4x32xf32>
    %c0_3 = arith.constant 0 : index
    %c0_4 = arith.constant 0 : index
    %4 = vector.load %arg8[%c0_3, %c0_4] : memref<1x2560xf32, #tpu.memory_space<vmem>>, vector<1x32xf32>
    %5 = vector.broadcast %4 : vector<1x32xf32> to vector<4x32xf32>
    %6 = arith.addf %3, %5 : vector<4x32xf32>
    %cst_5 = arith.constant 0.000000e+00 : f32
    %7 = vector.broadcast %cst_5 : f32 to vector<4x32xf32>
    %8 = arith.maximumf %6, %7 : vector<4x32xf32>
    %c0_6 = arith.constant 0 : index
    %c128 = arith.constant 128 : index
    %9 = vector.load %arg8[%c0_6, %c128] : memref<1x2560xf32, #tpu.memory_space<vmem>>, vector<1x32xf32>
    %c0_7 = arith.constant 0 : index
    %c256 = arith.constant 256 : index
    %10 = vector.load %arg8[%c0_7, %c256] : memref<1x2560xf32, #tpu.memory_space<vmem>>, vector<1x32xf32>
    %cst_8 = arith.constant dense<0.000000e+00> : vector<32xf32>
    %11 = vector.multi_reduction <add>, %8, %cst_8 [0] : vector<4x32xf32> to vector<32xf32>
    %12 = vector.shape_cast %11 : vector<32xf32> to vector<1x32xf32>
    %cst_9 = arith.constant 4.000000e+00 : f32
    %13 = vector.broadcast %cst_9 : f32 to vector<1x32xf32>
    %14 = arith.divf %12, %13 : vector<1x32xf32>
    %15 = vector.broadcast %14 : vector<1x32xf32> to vector<4x32xf32>
    %16 = arith.subf %8, %15 : vector<4x32xf32>
    %17 = arith.mulf %16, %16 : vector<4x32xf32>
    %cst_10 = arith.constant dense<0.000000e+00> : vector<32xf32>
    %18 = vector.multi_reduction <add>, %17, %cst_10 [0] : vector<4x32xf32> to vector<32xf32>
    %19 = vector.shape_cast %18 : vector<32xf32> to vector<1x32xf32>
    %cst_11 = arith.constant 4.000000e+00 : f32
    %20 = vector.broadcast %cst_11 : f32 to vector<1x32xf32>
    %21 = arith.divf %19, %20 : vector<1x32xf32>
    %22 = vector.broadcast %14 : vector<1x32xf32> to vector<4x32xf32>
    %23 = arith.subf %8, %22 : vector<4x32xf32>
    %24 = vector.broadcast %9 : vector<1x32xf32> to vector<4x32xf32>
    %25 = arith.mulf %24, %23 : vector<4x32xf32>
    %cst_12 = arith.constant 9.99999974E-6 : f32
    %26 = vector.broadcast %cst_12 : f32 to vector<1x32xf32>
    %27 = arith.addf %21, %26 : vector<1x32xf32>
    %28 = math.rsqrt %27 : vector<1x32xf32>
    %29 = vector.broadcast %28 : vector<1x32xf32> to vector<4x32xf32>
    %30 = arith.mulf %25, %29 : vector<4x32xf32>
    %31 = vector.broadcast %10 : vector<1x32xf32> to vector<4x32xf32>
    %32 = arith.addf %30, %31 : vector<4x32xf32>
    %33 = arith.truncf %32 : vector<4x32xf32> to vector<4x32xbf16>
    %c0_13 = arith.constant 0 : index
    %c0_14 = arith.constant 0 : index
    %34 = vector.load %arg3[%c0_13, %c0_14] : memref<32x128xbf16, #tpu.memory_space<vmem>>, vector<32x128xbf16>
    %cst_15 = arith.constant dense<0.000000e+00> : vector<4x128xf32>
    %35 = tpu.matmul %33, %34, %cst_15 {dimension_numbers = #tpu.dot_dimension_numbers<[1], [0], [0], [1], [0, 0, 1, 1], [], []>} : vector<4x32xbf16>, vector<32x128xbf16>, vector<4x128xf32> -> vector<4x128xf32>
    %c0_16 = arith.constant 0 : index
    %c384 = arith.constant 384 : index
    %36 = vector.load %arg8[%c0_16, %c384] : memref<1x2560xf32, #tpu.memory_space<vmem>>, vector<1x128xf32>
    %37 = vector.broadcast %36 : vector<1x128xf32> to vector<4x128xf32>
    %38 = arith.addf %35, %37 : vector<4x128xf32>
    %cst_17 = arith.constant 0.000000e+00 : f32
    %39 = vector.broadcast %cst_17 : f32 to vector<4x128xf32>
    %40 = arith.maximumf %38, %39 : vector<4x128xf32>
    %c0_18 = arith.constant 0 : index
    %c512 = arith.constant 512 : index
    %41 = vector.load %arg8[%c0_18, %c512] : memref<1x2560xf32, #tpu.memory_space<vmem>>, vector<1x128xf32>
    %c0_19 = arith.constant 0 : index
    %c640 = arith.constant 640 : index
    %42 = vector.load %arg8[%c0_19, %c640] : memref<1x2560xf32, #tpu.memory_space<vmem>>, vector<1x128xf32>
    %cst_20 = arith.constant dense<0.000000e+00> : vector<128xf32>
    %43 = vector.multi_reduction <add>, %40, %cst_20 [0] : vector<4x128xf32> to vector<128xf32>
    %44 = vector.shape_cast %43 : vector<128xf32> to vector<1x128xf32>
    %cst_21 = arith.constant 4.000000e+00 : f32
    %45 = vector.broadcast %cst_21 : f32 to vector<1x128xf32>
    %46 = arith.divf %44, %45 : vector<1x128xf32>
    %47 = vector.broadcast %46 : vector<1x128xf32> to vector<4x128xf32>
    %48 = arith.subf %40, %47 : vector<4x128xf32>
    %49 = arith.mulf %48, %48 : vector<4x128xf32>
    %cst_22 = arith.constant dense<0.000000e+00> : vector<128xf32>
    %50 = vector.multi_reduction <add>, %49, %cst_22 [0] : vector<4x128xf32> to vector<128xf32>
    %51 = vector.shape_cast %50 : vector<128xf32> to vector<1x128xf32>
    %cst_23 = arith.constant 4.000000e+00 : f32
    %52 = vector.broadcast %cst_23 : f32 to vector<1x128xf32>
    %53 = arith.divf %51, %52 : vector<1x128xf32>
    %54 = vector.broadcast %46 : vector<1x128xf32> to vector<4x128xf32>
    %55 = arith.subf %40, %54 : vector<4x128xf32>
    %56 = vector.broadcast %41 : vector<1x128xf32> to vector<4x128xf32>
    %57 = arith.mulf %56, %55 : vector<4x128xf32>
    %cst_24 = arith.constant 9.99999974E-6 : f32
    %58 = vector.broadcast %cst_24 : f32 to vector<1x128xf32>
    %59 = arith.addf %53, %58 : vector<1x128xf32>
    %60 = math.rsqrt %59 : vector<1x128xf32>
    %61 = vector.broadcast %60 : vector<1x128xf32> to vector<4x128xf32>
    %62 = arith.mulf %57, %61 : vector<4x128xf32>
    %63 = vector.broadcast %42 : vector<1x128xf32> to vector<4x128xf32>
    %64 = arith.addf %62, %63 : vector<4x128xf32>
    %65 = arith.truncf %64 : vector<4x128xf32> to vector<4x128xbf16>
    %c0_25 = arith.constant 0 : index
    %c0_26 = arith.constant 0 : index
    %66 = vector.load %arg4[%c0_25, %c0_26] : memref<128x512xbf16, #tpu.memory_space<vmem>>, vector<128x512xbf16>
    %cst_27 = arith.constant dense<0.000000e+00> : vector<4x512xf32>
    %67 = tpu.matmul %65, %66, %cst_27 {dimension_numbers = #tpu.dot_dimension_numbers<[1], [0], [0], [1], [0, 0, 1, 1], [], []>} : vector<4x128xbf16>, vector<128x512xbf16>, vector<4x512xf32> -> vector<4x512xf32>
    %c0_28 = arith.constant 0 : index
    %c768 = arith.constant 768 : index
    %68 = vector.load %arg8[%c0_28, %c768] : memref<1x2560xf32, #tpu.memory_space<vmem>>, vector<1x512xf32>
    %69 = vector.broadcast %68 : vector<1x512xf32> to vector<4x512xf32>
    %70 = arith.addf %67, %69 : vector<4x512xf32>
    %cst_29 = arith.constant 0.000000e+00 : f32
    %71 = vector.broadcast %cst_29 : f32 to vector<4x512xf32>
    %72 = arith.maximumf %70, %71 : vector<4x512xf32>
    %cst_30 = arith.constant dense<0.000000e+00> : vector<512xf32>
    %73 = vector.multi_reduction <add>, %72, %cst_30 [0] : vector<4x512xf32> to vector<512xf32>
    %74 = vector.shape_cast %73 : vector<512xf32> to vector<1x512xf32>
    %cst_31 = arith.constant 4.000000e+00 : f32
    %75 = vector.broadcast %cst_31 : f32 to vector<1x512xf32>
    %76 = arith.divf %74, %75 : vector<1x512xf32>
    %77 = arith.truncf %76 : vector<1x512xf32> to vector<1x512xbf16>
    %c0_32 = arith.constant 0 : index
    %c0_33 = arith.constant 0 : index
    %78 = vector.load %arg6[%c0_32, %c0_33] : memref<512x8xbf16, #tpu.memory_space<vmem>>, vector<512x8xbf16>
    %cst_34 = arith.constant dense<0.000000e+00> : vector<1x8xf32>
    %79 = tpu.matmul %77, %78, %cst_34 {dimension_numbers = #tpu.dot_dimension_numbers<[1], [0], [0], [1], [0, 0, 1, 1], [], []>} : vector<1x512xbf16>, vector<512x8xbf16>, vector<1x8xf32> -> vector<1x8xf32>
    %80 = arith.truncf %79 : vector<1x8xf32> to vector<1x8xbf16>
    %c0_35 = arith.constant 0 : index
    %c0_36 = arith.constant 0 : index
    %81 = vector.load %arg7[%c0_35, %c0_36] : memref<8x512xbf16, #tpu.memory_space<vmem>>, vector<8x512xbf16>
    %cst_37 = arith.constant dense<0.000000e+00> : vector<1x512xf32>
    %82 = tpu.matmul %80, %81, %cst_37 {dimension_numbers = #tpu.dot_dimension_numbers<[1], [0], [0], [1], [0, 0, 1, 1], [], []>} : vector<1x8xbf16>, vector<8x512xbf16>, vector<1x512xf32> -> vector<1x512xf32>
    %83 = vector.broadcast %82 : vector<1x512xf32> to vector<4x512xf32>
    %84 = arith.subf %72, %83 : vector<4x512xf32>
    %85 = arith.mulf %84, %84 : vector<4x512xf32>
    %cst_38 = arith.constant dense<0.000000e+00> : vector<512xf32>
    %86 = vector.multi_reduction <add>, %85, %cst_38 [0] : vector<4x512xf32> to vector<512xf32>
    %87 = vector.shape_cast %86 : vector<512xf32> to vector<1x512xf32>
    %cst_39 = arith.constant 4.000000e+00 : f32
    %88 = vector.broadcast %cst_39 : f32 to vector<1x512xf32>
    %89 = arith.divf %87, %88 : vector<1x512xf32>
    %90 = arith.truncf %89 : vector<1x512xf32> to vector<1x512xbf16>
    %c0_40 = arith.constant 0 : index
    %c0_41 = arith.constant 0 : index
    %91 = vector.load %arg6[%c0_40, %c0_41] : memref<512x8xbf16, #tpu.memory_space<vmem>>, vector<512x8xbf16>
    %cst_42 = arith.constant dense<0.000000e+00> : vector<1x8xf32>
    %92 = tpu.matmul %90, %91, %cst_42 {dimension_numbers = #tpu.dot_dimension_numbers<[1], [0], [0], [1], [0, 0, 1, 1], [], []>} : vector<1x512xbf16>, vector<512x8xbf16>, vector<1x8xf32> -> vector<1x8xf32>
    %93 = arith.truncf %92 : vector<1x8xf32> to vector<1x8xbf16>
    %c0_43 = arith.constant 0 : index
    %c0_44 = arith.constant 0 : index
    %94 = vector.load %arg7[%c0_43, %c0_44] : memref<8x512xbf16, #tpu.memory_space<vmem>>, vector<8x512xbf16>
    %cst_45 = arith.constant dense<0.000000e+00> : vector<1x512xf32>
    %95 = tpu.matmul %93, %94, %cst_45 {dimension_numbers = #tpu.dot_dimension_numbers<[1], [0], [0], [1], [0, 0, 1, 1], [], []>} : vector<1x8xbf16>, vector<8x512xbf16>, vector<1x512xf32> -> vector<1x512xf32>
    %c0_46 = arith.constant 0 : index
    %c1280 = arith.constant 1280 : index
    %96 = vector.load %arg8[%c0_46, %c1280] : memref<1x2560xf32, #tpu.memory_space<vmem>>, vector<1x512xf32>
    %97 = vector.broadcast %96 : vector<1x512xf32> to vector<4x512xf32>
    %98 = arith.mulf %97, %84 : vector<4x512xf32>
    %cst_47 = arith.constant 9.99999974E-6 : f32
    %99 = vector.broadcast %cst_47 : f32 to vector<1x512xf32>
    %100 = arith.addf %95, %99 : vector<1x512xf32>
    %101 = math.rsqrt %100 : vector<1x512xf32>
    %102 = vector.broadcast %101 : vector<1x512xf32> to vector<4x512xf32>
    %103 = arith.mulf %98, %102 : vector<4x512xf32>
    %c0_48 = arith.constant 0 : index
    %c1792 = arith.constant 1792 : index
    %104 = vector.load %arg8[%c0_48, %c1792] : memref<1x2560xf32, #tpu.memory_space<vmem>>, vector<1x512xf32>
    %105 = vector.broadcast %104 : vector<1x512xf32> to vector<4x512xf32>
    %106 = arith.addf %103, %105 : vector<4x512xf32>
    %107 = arith.truncf %106 : vector<4x512xf32> to vector<4x512xbf16>
    %c0_49 = arith.constant 0 : index
    %c0_50 = arith.constant 0 : index
    %108 = vector.load %arg5[%c0_49, %c0_50] : memref<512x256xbf16, #tpu.memory_space<vmem>>, vector<512x256xbf16>
    %cst_51 = arith.constant dense<0.000000e+00> : vector<4x256xf32>
    %109 = tpu.matmul %107, %108, %cst_51 {dimension_numbers = #tpu.dot_dimension_numbers<[1], [0], [0], [1], [0, 0, 1, 1], [], []>} : vector<4x512xbf16>, vector<512x256xbf16>, vector<4x256xf32> -> vector<4x256xf32>
    %c0_52 = arith.constant 0 : index
    %c2304 = arith.constant 2304 : index
    %110 = vector.load %arg8[%c0_52, %c2304] : memref<1x2560xf32, #tpu.memory_space<vmem>>, vector<1x256xf32>
    %111 = vector.broadcast %110 : vector<1x256xf32> to vector<4x256xf32>
    %112 = arith.addf %109, %111 : vector<4x256xf32>
    %113 = math.tanh %112 : vector<4x256xf32>
    %c0_53 = arith.constant 0 : index
    %c0_54 = arith.constant 0 : index
    %114 = vector.load %arg9[%c0_53, %c0_54] : memref<4x256xf32, #tpu.memory_space<vmem>>, vector<4x256xf32>
    tpu.vector_store %arg9[%c0_53, %c0_54], %113 {strides = array<i32>} : memref<4x256xf32, #tpu.memory_space<vmem>>, vector<4x256xf32>,
    return
  }
  func.func @transform_0(%arg0: i32) -> (i32, i32) {
    %c0_i32 = arith.constant 0 : i32
    %c0_i32_0 = arith.constant 0 : i32
    %c0_i32_1 = arith.constant 0 : i32
    return %c0_i32, %c0_i32_0 : i32, i32
  }
  func.func @transform_1(%arg0: i32) -> (i32, i32) {
    %c0_i32 = arith.constant 0 : i32
    %c0_i32_0 = arith.constant 0 : i32
    %c0_i32_1 = arith.constant 0 : i32
    return %c0_i32, %c0_i32_0 : i32, i32
  }
  func.func @transform_2(%arg0: i32) -> (i32, i32) {
    %c0_i32 = arith.constant 0 : i32
    %c0_i32_0 = arith.constant 0 : i32
    %c0_i32_1 = arith.constant 0 : i32
    return %c0_i32, %c0_i32_0 : i32, i32
  }
  func.func @transform_3(%arg0: i32) -> (i32, i32) {
    %c0_i32 = arith.constant 0 : i32
    %c0_i32_0 = arith.constant 0 : i32
    %c0_i32_1 = arith.constant 0 : i32
    return %c0_i32, %c0_i32_0 : i32, i32
  }
  func.func @transform_4(%arg0: i32) -> (i32, i32) {
    %c0_i32 = arith.constant 0 : i32
    %c0_i32_0 = arith.constant 0 : i32
    %c0_i32_1 = arith.constant 0 : i32
    return %c0_i32, %c0_i32_0 : i32, i32
  }
  func.func @transform_5(%arg0: i32) -> (i32, i32) {
    %c0_i32 = arith.constant 0 : i32
    %c0_i32_0 = arith.constant 0 : i32
    %c0_i32_1 = arith.constant 0 : i32
    return %c0_i32, %c0_i32_0 : i32, i32
  }
  func.func @transform_6(%arg0: i32) -> (i32, i32) {
    %c0_i32 = arith.constant 0 : i32
    %c0_i32_0 = arith.constant 0 : i32
    %c0_i32_1 = arith.constant 0 : i32
    return %c0_i32, %c0_i32_0 : i32, i32
  }
  func.func @transform_7(%arg0: i32) -> (i32, i32) {
    %c0_i32 = arith.constant 0 : i32
    %c0_i32_0 = arith.constant 0 : i32
    %c0_i32_1 = arith.constant 0 : i32
    return %c0_i32, %c0_i32_0 : i32, i32
  }
  func.func @transform_8(%arg0: i32) -> (i32, i32) {
    %c0_i32 = arith.constant 0 : i32
    %c0_i32_0 = arith.constant 0 : i32
    %c0_i32_1 = arith.constant 0 : i32
    return %c0_i32, %c0_i32_0 : i32, i32
  }
}

</mosaic_0001>

<llo_original>
// kernel: _lambda_.1
$region0: #{_lambda_.1}
  #allocation0 [shape = 'u32[]', space=smem, size = 0x4, offset = 0x4, fixed_abs, tag = 'smem constant byte address 0x4 - core index']
  #allocation1 [shape = 'u32[144,128]{1,0:T(1,128)}', space=vmem, size = 0x12000, scoped, tag = 'internal scratch']
  %s0 = inlined_call_operand.vmem [shape: f32[4,16], index: 0, kind: input, shape index: {}]
  %s1 = inlined_call_operand.vmem [shape: bf16[16,32], index: 1, kind: input, shape index: {}]
  %s2 = inlined_call_operand.vmem [shape: bf16[32,128], index: 2, kind: input, shape index: {}]
  %s3 = inlined_call_operand.vmem [shape: bf16[128,512], index: 3, kind: input, shape index: {}]
  %s4 = inlined_call_operand.vmem [shape: bf16[512,256], index: 4, kind: input, shape index: {}]
  %s5 = inlined_call_operand.vmem [shape: bf16[512,8], index: 5, kind: input, shape index: {}]
  %s6 = inlined_call_operand.vmem [shape: bf16[8,512], index: 6, kind: input, shape index: {}]
  %s7 = inlined_call_operand.vmem [shape: f32[1,2560], index: 7, kind: input, shape index: {}]
  %s8 = inlined_call_operand.vmem [shape: f32[4,256], index: 8, kind: output, shape index: {}]
  %s9 = sld [smem:[#allocation0]]
  $region42: #{_lambda_.1} parent=0
    _
  %s11 = ssub.s32 1, %s9
  %s12 = scalar_select 0, %s11, %s9
  // Predicated region
  $region2: #{_lambda_.1} parent=0 // pred_check
    _
  $region3: #{_lambda_.1} parent=0 // pred_check_branch
    %14 = sbr.rel (0) target = $region5
  $region4: #{_lambda_.1} parent=0 // pred_region
    _
  $region5: #{_lambda_.1} parent=0 // pred_fallthru
    _
  // Predicated region
  $region6: #{_lambda_.1} parent=0 // pred_check
    _
  $region7: #{_lambda_.1} parent=0 // pred_check_branch
    %16 = sbr.rel (0) target = $region9
  $region8: #{_lambda_.1} parent=0 // pred_region
    _
  $region9: #{_lambda_.1} parent=0 // pred_fallthru
    _
  // Predicated region
  $region10: #{_lambda_.1} parent=0 // pred_check
    _
  $region11: #{_lambda_.1} parent=0 // pred_check_branch
    %18 = sbr.rel (0) target = $region13
  $region12: #{_lambda_.1} parent=0 // pred_region
    _
  $region13: #{_lambda_.1} parent=0 // pred_fallthru
    _
  // Predicated region
  $region14: #{_lambda_.1} parent=0 // pred_check
    _
  $region15: #{_lambda_.1} parent=0 // pred_check_branch
    %20 = sbr.rel (0) target = $region17
  $region16: #{_lambda_.1} parent=0 // pred_region
    _
  $region17: #{_lambda_.1} parent=0 // pred_fallthru
    _
  // Predicated region
  $region18: #{_lambda_.1} parent=0 // pred_check
    _
  $region19: #{_lambda_.1} parent=0 // pred_check_branch
    %22 = sbr.rel (0) target = $region21
  $region20: #{_lambda_.1} parent=0 // pred_region
    _
  $region21: #{_lambda_.1} parent=0 // pred_fallthru
    _
  // Predicated region
  $region22: #{_lambda_.1} parent=0 // pred_check
    _
  $region23: #{_lambda_.1} parent=0 // pred_check_branch
    %24 = sbr.rel (0) target = $region25
  $region24: #{_lambda_.1} parent=0 // pred_region
    _
  $region25: #{_lambda_.1} parent=0 // pred_fallthru
    _
  // Predicated region
  $region26: #{_lambda_.1} parent=0 // pred_check
    _
  $region27: #{_lambda_.1} parent=0 // pred_check_branch
    %26 = sbr.rel (0) target = $region29
  $region28: #{_lambda_.1} parent=0 // pred_region
    _
  $region29: #{_lambda_.1} parent=0 // pred_fallthru
    _
  // Predicated region
  $region30: #{_lambda_.1} parent=0 // pred_check
    _
  $region31: #{_lambda_.1} parent=0 // pred_check_branch
    %28 = sbr.rel (0) target = $region33
  $region32: #{_lambda_.1} parent=0 // pred_region
    _
  $region33: #{_lambda_.1} parent=0 // pred_fallthru
    _
  %v30 = vld [vmem:[%s0] sm:$0xf]
  %v31 = vpack.c.bf16 %v30, %v30
  %v32 = vld [vmem:[%s1] sm:$0xf]
  %v33 = vld [vmem:[%s1 + $0x4] sm:$0xf]
  %v34 = vld [vmem:[%s7] sm:$0x1]
  %v36 = vlaneseq
  %v37 = vshrl.u32 %v36, 7
  %v38 = vsub.s32 0, %v37
  %v39 = vrot.slane %v34, %v38
  %v43 = vunpack.c.l.b16 %v32
  %v44 = vunpack.c.l.b16 %v33
  %v45 = vpack.c.b16 %v44, %v43
  %vm47 = vcmask 130048
  %v49 = vsel %vm47, %v31, 0
  %51 = vmatprep.subr.bf16.mxu0 0
  %52 = vmatpush1.bf16.msra.mxu0 %v45
  %53 = vmatprep.subr.bf16.mxu0 0
  %54 = vmatpush1.bf16.msra.mxu0 0
  %55 = vmatprep.subr.bf16.mxu0 0
  %56 = vmatpush1.bf16.msra.mxu0 0
  %57 = vmatprep.subr.bf16.mxu0 0
  %58 = vmatpush1.bf16.msra.mxu0 0
  %59 = vmatprep.subr.bf16.mxu0 0
  %60 = vmatpush1.bf16.msra.mxu0 0
  %61 = vmatprep.subr.bf16.mxu0 0
  %62 = vmatpush1.bf16.msra.mxu0 0
  %63 = vmatprep.subr.bf16.mxu0 0
  %64 = vmatpush1.bf16.msra.mxu0 0
  %65 = vmatprep.subr.bf16.mxu0 0
  %66 = vmatpush1.bf16.msra.mxu0 0
  %67 = vmatprep.subr.bf16.mxu0 0
  %68 = vmatpush1.bf16.msra.mxu0 0
  %69 = vmatprep.subr.bf16.mxu0 0
  %70 = vmatpush1.bf16.msra.mxu0 0
  %71 = vmatprep.subr.bf16.mxu0 0
  %72 = vmatpush1.bf16.msra.mxu0 0
  %73 = vmatprep.subr.bf16.mxu0 0
  %74 = vmatpush1.bf16.msra.mxu0 0
  %75 = vmatprep.subr.bf16.mxu0 0
  %76 = vmatpush1.bf16.msra.mxu0 0
  %77 = vmatprep.subr.bf16.mxu0 0
  %78 = vmatpush1.bf16.msra.mxu0 0
  %79 = vmatprep.subr.bf16.mxu0 0
  %80 = vmatpush1.bf16.msra.mxu0 0
  %81 = vmatprep.subr.bf16.mxu0 0
  %82 = vmatpush1.bf16.msra.mxu0 0
  %83 = vmatprep.mubr.bf16.mxu0 0
  %84 = vmatmul.mubr.bf16.gmra.mrb[0].mxu0 %v49
  %v85 = vpop.f32.mrb[0].mxu0
  %v86 = vadd.f32 %v39, %v85
  %v87 = vpop.f32.mrb[0].mxu0
  %v88 = vpop.f32.mrb[0].mxu0
  %v89 = vpop.f32.mrb[0].mxu0
  %90 = vdwg.mxu0
  %v91 = vmax.f32 %v86, 0.0
  %v92 = vld [vmem:[%s7 + $0x1] sm:$0x1]
  %v93 = vld [vmem:[%s7 + $0x2] sm:$0x1]
  %vm94 = vcmask 257024
  %v95 = vsel %vm94, %v91, 0.0
  %v96 = vrot.slane %v95, 4
  %v97 = vadd.f32 %v95, %v96
  %v98 = vrot.slane %v97, 2
  %v99 = vadd.f32 %v97, %v98
  %v100 = vrot.slane %v99, 1
  %v101 = vadd.f32 %v99, %v100
  %v102 = vrcp.pop 4.0
  %v103 = vmul.f32 %v101, %v102
  %v104 = vsub.f32 %v91, %v103
  %v105 = vmul.f32 %v104, %v104
  %v106 = vsel %vm94, %v105, 0.0
  %v107 = vrot.slane %v106, 4
  %v108 = vadd.f32 %v106, %v107
  %v109 = vrot.slane %v108, 2
  %v110 = vadd.f32 %v108, %v109
  %v111 = vrot.slane %v110, 1
  %v112 = vadd.f32 %v110, %v111
  %v113 = vmul.f32 %v112, %v102
  %v115 = vlaneseq
  %v116 = vshrl.u32 %v115, 7
  %v117 = vsub.s32 0, %v116
  %v118 = vrot.slane %v92, %v117
  %v120 = vmul.f32 %v118, %v104
  %v121 = vadd.f32 %v113, 1e-05
  %v122 = vrsqrt.pop %v121
  %v123 = vmul.f32 %v120, %v122
  %v125 = vlaneseq
  %v126 = vshrl.u32 %v125, 7
  %v127 = vsub.s32 0, %v126
  %v128 = vrot.slane %v93, %v127
  %v130 = vadd.f32 %v123, %v128
  %v131 = vpack.c.bf16 %v130, %v130
  %v132 = vld [vmem:[%s2] sm:$0xf]
  %v133 = vld [vmem:[%s2 + $0x4] sm:$0xf]
  %v134 = vld [vmem:[%s2 + $0x8] sm:$0xf]
  %v135 = vld [vmem:[%s2 + $0xc] sm:$0xf]
  %v136 = vld [vmem:[%s7 + $0x3] sm:$0x1]
  %v138 = vlaneseq
  %v139 = vshrl.u32 %v138, 7
  %v140 = vsub.s32 0, %v139
  %v141 = vrot.slane %v136, %v140
  %v147 = vunpack.c.l.b16 %v132
  %v148 = vunpack.c.l.b16 %v133
  %v149 = vunpack.c.l.b16 %v134
  %v150 = vunpack.c.l.b16 %v135
  %v151 = vpack.c.b16 %v148, %v147
  %v152 = vpack.c.b16 %v150, %v149
  %vm155 = vcmask 261120
  %v157 = vsel %vm155, %v131, 0
  %159 = vmatprep.subr.bf16.mxu0 0
  %160 = vmatpush1.bf16.msra.mxu0 %v151
  %161 = vmatprep.subr.bf16.mxu0 0
  %162 = vmatpush1.bf16.msra.mxu0 %v152
  %163 = vmatprep.subr.bf16.mxu0 0
  %164 = vmatpush1.bf16.msra.mxu0 0
  %165 = vmatprep.subr.bf16.mxu0 0
  %166 = vmatpush1.bf16.msra.mxu0 0
  %167 = vmatprep.subr.bf16.mxu0 0
  %168 = vmatpush1.bf16.msra.mxu0 0
  %169 = vmatprep.subr.bf16.mxu0 0
  %170 = vmatpush1.bf16.msra.mxu0 0
  %171 = vmatprep.subr.bf16.mxu0 0
  %172 = vmatpush1.bf16.msra.mxu0 0
  %173 = vmatprep.subr.bf16.mxu0 0
  %174 = vmatpush1.bf16.msra.mxu0 0
  %175 = vmatprep.subr.bf16.mxu0 0
  %176 = vmatpush1.bf16.msra.mxu0 0
  %177 = vmatprep.subr.bf16.mxu0 0
  %178 = vmatpush1.bf16.msra.mxu0 0
  %179 = vmatprep.subr.bf16.mxu0 0
  %180 = vmatpush1.bf16.msra.mxu0 0
  %181 = vmatprep.subr.bf16.mxu0 0
  %182 = vmatpush1.bf16.msra.mxu0 0
  %183 = vmatprep.subr.bf16.mxu0 0
  %184 = vmatpush1.bf16.msra.mxu0 0
  %185 = vmatprep.subr.bf16.mxu0 0
  %186 = vmatpush1.bf16.msra.mxu0 0
  %187 = vmatprep.subr.bf16.mxu0 0
  %188 = vmatpush1.bf16.msra.mxu0 0
  %189 = vmatprep.subr.bf16.mxu0 0
  %190 = vmatpush1.bf16.msra.mxu0 0
  %191 = vmatprep.mubr.bf16.mxu0 0
  %192 = vmatmul.mubr.bf16.gmra.mrb[0].mxu0 %v157
  %v193 = vpop.f32.mrb[0].mxu0
  %v194 = vadd.f32 %v141, %v193
  %v195 = vpop.f32.mrb[0].mxu0
  %v196 = vpop.f32.mrb[0].mxu0
  %v197 = vpop.f32.mrb[0].mxu0
  %198 = vdwg.mxu0
  %v199 = vmax.f32 %v194, 0.0
  %v200 = vld [vmem:[%s7 + $0x4] sm:$0x1]
  %v201 = vld [vmem:[%s7 + $0x5] sm:$0x1]
  %vm202 = vcmask 1043456
  %v203 = vsel %vm202, %v199, 0.0
  %v204 = vrot.slane %v203, 4
  %v205 = vadd.f32 %v203, %v204
  %v206 = vrot.slane %v205, 2
  %v207 = vadd.f32 %v205, %v206
  %v208 = vrot.slane %v207, 1
  %v209 = vadd.f32 %v207, %v208
  %v210 = vmul.f32 %v209, %v102
  %v211 = vsub.f32 %v199, %v210
  %v212 = vmul.f32 %v211, %v211
  %v213 = vsel %vm202, %v212, 0.0
  %v214 = vrot.slane %v213, 4
  %v215 = vadd.f32 %v213, %v214
  %v216 = vrot.slane %v215, 2
  %v217 = vadd.f32 %v215, %v216
  %v218 = vrot.slane %v217, 1
  %v219 = vadd.f32 %v217, %v218
  %v220 = vmul.f32 %v219, %v102
  %v222 = vlaneseq
  %v223 = vshrl.u32 %v222, 7
  %v224 = vsub.s32 0, %v223
  %v225 = vrot.slane %v200, %v224
  %v227 = vmul.f32 %v225, %v211
  %v228 = vadd.f32 %v220, 1e-05
  %v229 = vrsqrt.pop %v228
  %v230 = vmul.f32 %v227, %v229
  %v232 = vlaneseq
  %v233 = vshrl.u32 %v232, 7
  %v234 = vsub.s32 0, %v233
  %v235 = vrot.slane %v201, %v234
  %v237 = vadd.f32 %v230, %v235
  %v238 = vpack.c.bf16 %v237, %v237
  %v239 = vld [vmem:[%s3] sm:$0xff]
  %v240 = vld [vmem:[%s3 + $0x8] sm:$0xff]
  %v241 = vld [vmem:[%s3 + $0x10] sm:$0xff]
  %v242 = vld [vmem:[%s3 + $0x18] sm:$0xff]
  %v243 = vld [vmem:[%s3 + $0x20] sm:$0xff]
  %v244 = vld [vmem:[%s3 + $0x28] sm:$0xff]
  %v245 = vld [vmem:[%s3 + $0x30] sm:$0xff]
  %v246 = vld [vmem:[%s3 + $0x38] sm:$0xff]
  %v247 = vld [vmem:[%s3 + $0x40] sm:$0xff]
  %v248 = vld [vmem:[%s3 + $0x48] sm:$0xff]
  %v249 = vld [vmem:[%s3 + $0x50] sm:$0xff]
  %v250 = vld [vmem:[%s3 + $0x58] sm:$0xff]
  %v251 = vld [vmem:[%s3 + $0x60] sm:$0xff]
  %v252 = vld [vmem:[%s3 + $0x68] sm:$0xff]
  %v253 = vld [vmem:[%s3 + $0x70] sm:$0xff]
  %v254 = vld [vmem:[%s3 + $0x78] sm:$0xff]
  %v255 = vld [vmem:[%s3 + $0x80] sm:$0xff]
  %v256 = vld [vmem:[%s3 + $0x88] sm:$0xff]
  %v257 = vld [vmem:[%s3 + $0x90] sm:$0xff]
  %v258 = vld [vmem:[%s3 + $0x98] sm:$0xff]
  %v259 = vld [vmem:[%s3 + $0xa0] sm:$0xff]
  %v260 = vld [vmem:[%s3 + $0xa8] sm:$0xff]
  %v261 = vld [vmem:[%s3 + $0xb0] sm:$0xff]
  %v262 = vld [vmem:[%s3 + $0xb8] sm:$0xff]
  %v263 = vld [vmem:[%s3 + $0xc0] sm:$0xff]
  %v264 = vld [vmem:[%s3 + $0xc8] sm:$0xff]
  %v265 = vld [vmem:[%s3 + $0xd0] sm:$0xff]
  %v266 = vld [vmem:[%s3 + $0xd8] sm:$0xff]
  %v267 = vld [vmem:[%s3 + $0xe0] sm:$0xff]
  %v268 = vld [vmem:[%s3 + $0xe8] sm:$0xff]
  %v269 = vld [vmem:[%s3 + $0xf0] sm:$0xff]
  %v270 = vld [vmem:[%s3 + $0xf8] sm:$0xff]
  %v271 = vld [vmem:[%s7 + $0x6] sm:$0xf]
  %v273 = vlaneseq
  %v274 = vshrl.u32 %v273, 7
  %v275 = vsub.s32 0, %v274
  %v276 = vrot.slane %v271, %v275
  %v277 = vlaneseq
  %v278 = vshrl.u32 %v277, 7
  %v279 = vsub.s32 1, %v278
  %v280 = vrot.slane %v271, %v279
  %v281 = vlaneseq
  %v282 = vshrl.u32 %v281, 7
  %v283 = vsub.s32 2, %v282
  %v284 = vrot.slane %v271, %v283
  %v285 = vlaneseq
  %v286 = vshrl.u32 %v285, 7
  %v287 = vsub.s32 3, %v286
  %v288 = vrot.slane %v271, %v287
  %v325 = vunpack.c.l.b16 %v239
  %v326 = vunpack.c.h.b16 %v239
  %v327 = vunpack.c.l.b16 %v240
  %v328 = vunpack.c.h.b16 %v240
  %v329 = vunpack.c.l.b16 %v241
  %v330 = vunpack.c.h.b16 %v241
  %v331 = vunpack.c.l.b16 %v242
  %v332 = vunpack.c.h.b16 %v242
  %v333 = vunpack.c.l.b16 %v243
  %v334 = vunpack.c.h.b16 %v243
  %v335 = vunpack.c.l.b16 %v244
  %v336 = vunpack.c.h.b16 %v244
  %v337 = vunpack.c.l.b16 %v245
  %v338 = vunpack.c.h.b16 %v245
  %v339 = vunpack.c.l.b16 %v246
  %v340 = vunpack.c.h.b16 %v246
  %v341 = vunpack.c.l.b16 %v247
  %v342 = vunpack.c.h.b16 %v247
  %v343 = vunpack.c.l.b16 %v248
  %v344 = vunpack.c.h.b16 %v248
  %v345 = vunpack.c.l.b16 %v249
  %v346 = vunpack.c.h.b16 %v249
  %v347 = vunpack.c.l.b16 %v250
  %v348 = vunpack.c.h.b16 %v250
  %v349 = vunpack.c.l.b16 %v251
  %v350 = vunpack.c.h.b16 %v251
  %v351 = vunpack.c.l.b16 %v252
  %v352 = vunpack.c.h.b16 %v252
  %v353 = vunpack.c.l.b16 %v253
  %v354 = vunpack.c.h.b16 %v253
  %v355 = vunpack.c.l.b16 %v254
  %v356 = vunpack.c.h.b16 %v254
  %v357 = vunpack.c.l.b16 %v255
  %v358 = vunpack.c.h.b16 %v255
  %v359 = vunpack.c.l.b16 %v256
  %v360 = vunpack.c.h.b16 %v256
  %v361 = vunpack.c.l.b16 %v257
  %v362 = vunpack.c.h.b16 %v257
  %v363 = vunpack.c.l.b16 %v258
  %v364 = vunpack.c.h.b16 %v258
  %v365 = vunpack.c.l.b16 %v259
  %v366 = vunpack.c.h.b16 %v259
  %v367 = vunpack.c.l.b16 %v260
  %v368 = vunpack.c.h.b16 %v260
  %v369 = vunpack.c.l.b16 %v261
  %v370 = vunpack.c.h.b16 %v261
  %v371 = vunpack.c.l.b16 %v262
  %v372 = vunpack.c.h.b16 %v262
  %v373 = vunpack.c.l.b16 %v263
  %v374 = vunpack.c.h.b16 %v263
  %v375 = vunpack.c.l.b16 %v264
  %v376 = vunpack.c.h.b16 %v264
  %v377 = vunpack.c.l.b16 %v265
  %v378 = vunpack.c.h.b16 %v265
  %v379 = vunpack.c.l.b16 %v266
  %v380 = vunpack.c.h.b16 %v266
  %v381 = vunpack.c.l.b16 %v267
  %v382 = vunpack.c.h.b16 %v267
  %v383 = vunpack.c.l.b16 %v268
  %v384 = vunpack.c.h.b16 %v268
  %v385 = vunpack.c.l.b16 %v269
  %v386 = vunpack.c.h.b16 %v269
  %v387 = vunpack.c.l.b16 %v270
  %v388 = vunpack.c.h.b16 %v270
  %v389 = vpack.c.b16 %v329, %v325
  %v390 = vpack.c.b16 %v330, %v326
  %v391 = vpack.c.b16 %v331, %v327
  %v392 = vpack.c.b16 %v332, %v328
  %v393 = vpack.c.b16 %v337, %v333
  %v394 = vpack.c.b16 %v338, %v334
  %v395 = vpack.c.b16 %v339, %v335
  %v396 = vpack.c.b16 %v340, %v336
  %v397 = vpack.c.b16 %v345, %v341
  %v398 = vpack.c.b16 %v346, %v342
  %v399 = vpack.c.b16 %v347, %v343
  %v400 = vpack.c.b16 %v348, %v344
  %v401 = vpack.c.b16 %v353, %v349
  %v402 = vpack.c.b16 %v354, %v350
  %v403 = vpack.c.b16 %v355, %v351
  %v404 = vpack.c.b16 %v356, %v352
  %v405 = vpack.c.b16 %v361, %v357
  %v406 = vpack.c.b16 %v362, %v358
  %v407 = vpack.c.b16 %v363, %v359
  %v408 = vpack.c.b16 %v364, %v360
  %v409 = vpack.c.b16 %v369, %v365
  %v410 = vpack.c.b16 %v370, %v366
  %v411 = vpack.c.b16 %v371, %v367
  %v412 = vpack.c.b16 %v372, %v368
  %v413 = vpack.c.b16 %v377, %v373
  %v414 = vpack.c.b16 %v378, %v374
  %v415 = vpack.c.b16 %v379, %v375
  %v416 = vpack.c.b16 %v380, %v376
  %v417 = vpack.c.b16 %v385, %v381
  %v418 = vpack.c.b16 %v386, %v382
  %v419 = vpack.c.b16 %v387, %v383
  %v420 = vpack.c.b16 %v388, %v384
  %453 = vmatprep.subr.bf16.mxu0 %v390
  %454 = vmatpush1.bf16.msra.mxu0 %v389
  %455 = vmatprep.subr.bf16.mxu0 %v394
  %456 = vmatpush1.bf16.msra.mxu0 %v393
  %457 = vmatprep.subr.bf16.mxu0 %v398
  %458 = vmatpush1.bf16.msra.mxu0 %v397
  %459 = vmatprep.subr.bf16.mxu0 %v402
  %460 = vmatpush1.bf16.msra.mxu0 %v401
  %461 = vmatprep.subr.bf16.mxu0 %v406
  %462 = vmatpush1.bf16.msra.mxu0 %v405
  %463 = vmatprep.subr.bf16.mxu0 %v410
  %464 = vmatpush1.bf16.msra.mxu0 %v409
  %465 = vmatprep.subr.bf16.mxu0 %v414
  %466 = vmatpush1.bf16.msra.mxu0 %v413
  %467 = vmatprep.subr.bf16.mxu0 %v418
  %468 = vmatpush1.bf16.msra.mxu0 %v417
  %469 = vmatprep.subr.bf16.mxu0 0
  %470 = vmatpush1.bf16.msra.mxu0 0
  %471 = vmatprep.subr.bf16.mxu0 0
  %472 = vmatpush1.bf16.msra.mxu0 0
  %473 = vmatprep.subr.bf16.mxu0 0
  %474 = vmatpush1.bf16.msra.mxu0 0
  %475 = vmatprep.subr.bf16.mxu0 0
  %476 = vmatpush1.bf16.msra.mxu0 0
  %477 = vmatprep.subr.bf16.mxu0 0
  %478 = vmatpush1.bf16.msra.mxu0 0
  %479 = vmatprep.subr.bf16.mxu0 0
  %480 = vmatpush1.bf16.msra.mxu0 0
  %481 = vmatprep.subr.bf16.mxu0 0
  %482 = vmatpush1.bf16.msra.mxu0 0
  %483 = vmatprep.subr.bf16.mxu0 0
  %484 = vmatpush1.bf16.msra.mxu0 0
  %485 = vmatprep.mubr.bf16.mxu0 0
  %486 = vmatmul.mubr.bf16.gmra.mrb[0].mxu0 %v238
  %v487 = vpop.f32.mrb[0].mxu0
  %v488 = vadd.f32 %v276, %v487
  %v489 = vpop.f32.mrb[0].mxu0
  %v490 = vadd.f32 %v280, %v489
  %v491 = vpop.f32.mrb[0].mxu0
  %v492 = vpop.f32.mrb[0].mxu0
  %493 = vdwg.mxu0
  %494 = vmatprep.subr.bf16.mxu0 %v392
  %495 = vmatpush1.bf16.msra.mxu0 %v391
  %496 = vmatprep.subr.bf16.mxu0 %v396
  %497 = vmatpush1.bf16.msra.mxu0 %v395
  %498 = vmatprep.subr.bf16.mxu0 %v400
  %499 = vmatpush1.bf16.msra.mxu0 %v399
  %500 = vmatprep.subr.bf16.mxu0 %v404
  %501 = vmatpush1.bf16.msra.mxu0 %v403
  %502 = vmatprep.subr.bf16.mxu0 %v408
  %503 = vmatpush1.bf16.msra.mxu0 %v407
  %504 = vmatprep.subr.bf16.mxu0 %v412
  %505 = vmatpush1.bf16.msra.mxu0 %v411
  %506 = vmatprep.subr.bf16.mxu0 %v416
  %507 = vmatpush1.bf16.msra.mxu0 %v415
  %508 = vmatprep.subr.bf16.mxu0 %v420
  %509 = vmatpush1.bf16.msra.mxu0 %v419
  %510 = vmatprep.subr.bf16.mxu0 0
  %511 = vmatpush1.bf16.msra.mxu0 0
  %512 = vmatprep.subr.bf16.mxu0 0
  %513 = vmatpush1.bf16.msra.mxu0 0
  %514 = vmatprep.subr.bf16.mxu0 0
  %515 = vmatpush1.bf16.msra.mxu0 0
  %516 = vmatprep.subr.bf16.mxu0 0
  %517 = vmatpush1.bf16.msra.mxu0 0
  %518 = vmatprep.subr.bf16.mxu0 0
  %519 = vmatpush1.bf16.msra.mxu0 0
  %520 = vmatprep.subr.bf16.mxu0 0
  %521 = vmatpush1.bf16.msra.mxu0 0
  %522 = vmatprep.subr.bf16.mxu0 0
  %523 = vmatpush1.bf16.msra.mxu0 0
  %524 = vmatprep.subr.bf16.mxu0 0
  %525 = vmatpush1.bf16.msra.mxu0 0
  %526 = vmatprep.mubr.bf16.mxu0 0
  %527 = vmatmul.mubr.bf16.gmra.mrb[0].mxu0 %v238
  %v528 = vpop.f32.mrb[0].mxu0
  %v529 = vadd.f32 %v284, %v528
  %v530 = vpop.f32.mrb[0].mxu0
  %v531 = vadd.f32 %v288, %v530
  %v532 = vpop.f32.mrb[0].mxu0
  %v533 = vpop.f32.mrb[0].mxu0
  %534 = vdwg.mxu0
  %v535 = vmax.f32 %v488, 0.0
  %v536 = vmax.f32 %v490, 0.0
  %v537 = vmax.f32 %v529, 0.0
  %v538 = vmax.f32 %v531, 0.0
  %v539 = vsel %vm202, %v535, 0.0
  %v540 = vrot.slane %v539, 4
  %v541 = vadd.f32 %v539, %v540
  %v542 = vrot.slane %v541, 2
  %v543 = vadd.f32 %v541, %v542
  %v544 = vrot.slane %v543, 1
  %v545 = vadd.f32 %v543, %v544
  %v546 = vsel %vm202, %v536, 0.0
  %v547 = vrot.slane %v546, 4
  %v548 = vadd.f32 %v546, %v547
  %v549 = vrot.slane %v548, 2
  %v550 = vadd.f32 %v548, %v549
  %v551 = vrot.slane %v550, 1
  %v552 = vadd.f32 %v550, %v551
  %v553 = vsel %vm202, %v537, 0.0
  %v554 = vrot.slane %v553, 4
  %v555 = vadd.f32 %v553, %v554
  %v556 = vrot.slane %v555, 2
  %v557 = vadd.f32 %v555, %v556
  %v558 = vrot.slane %v557, 1
  %v559 = vadd.f32 %v557, %v558
  %v560 = vsel %vm202, %v538, 0.0
  %v561 = vrot.slane %v560, 4
  %v562 = vadd.f32 %v560, %v561
  %v563 = vrot.slane %v562, 2
  %v564 = vadd.f32 %v562, %v563
  %v565 = vrot.slane %v564, 1
  %v566 = vadd.f32 %v564, %v565
  %v567 = vmul.f32 %v545, %v102
  %v568 = vmul.f32 %v552, %v102
  %v569 = vmul.f32 %v559, %v102
  %v570 = vmul.f32 %v566, %v102
  %v571 = vpack.c.bf16 %v567, %v567
  %v572 = vpack.c.bf16 %v568, %v568
  %v573 = vpack.c.bf16 %v569, %v569
  %v574 = vpack.c.bf16 %v570, %v570
  %v575 = vld [vmem:[%s5] sm:$0xf]
  %v576 = vld [vmem:[%s5 + $0x4] sm:$0xf]
  %v577 = vld [vmem:[%s5 + $0x8] sm:$0xf]
  %v578 = vld [vmem:[%s5 + $0xc] sm:$0xf]
  %v579 = vld [vmem:[%s5 + $0x10] sm:$0xf]
  %v580 = vld [vmem:[%s5 + $0x14] sm:$0xf]
  %v581 = vld [vmem:[%s5 + $0x18] sm:$0xf]
  %v582 = vld [vmem:[%s5 + $0x1c] sm:$0xf]
  %v583 = vld [vmem:[%s5 + $0x20] sm:$0xf]
  %v584 = vld [vmem:[%s5 + $0x24] sm:$0xf]
  %v585 = vld [vmem:[%s5 + $0x28] sm:$0xf]
  %v586 = vld [vmem:[%s5 + $0x2c] sm:$0xf]
  %v587 = vld [vmem:[%s5 + $0x30] sm:$0xf]
  %v588 = vld [vmem:[%s5 + $0x34] sm:$0xf]
  %v589 = vld [vmem:[%s5 + $0x38] sm:$0xf]
  %v590 = vld [vmem:[%s5 + $0x3c] sm:$0xf]
  %v591 = vld [vmem:[%s5 + $0x40] sm:$0xf]
  %v592 = vld [vmem:[%s5 + $0x44] sm:$0xf]
  %v593 = vld [vmem:[%s5 + $0x48] sm:$0xf]
  %v594 = vld [vmem:[%s5 + $0x4c] sm:$0xf]
  %v595 = vld [vmem:[%s5 + $0x50] sm:$0xf]
  %v596 = vld [vmem:[%s5 + $0x54] sm:$0xf]
  %v597 = vld [vmem:[%s5 + $0x58] sm:$0xf]
  %v598 = vld [vmem:[%s5 + $0x5c] sm:$0xf]
  %v599 = vld [vmem:[%s5 + $0x60] sm:$0xf]
  %v600 = vld [vmem:[%s5 + $0x64] sm:$0xf]
  %v601 = vld [vmem:[%s5 + $0x68] sm:$0xf]
  %v602 = vld [vmem:[%s5 + $0x6c] sm:$0xf]
  %v603 = vld [vmem:[%s5 + $0x70] sm:$0xf]
  %v604 = vld [vmem:[%s5 + $0x74] sm:$0xf]
  %v605 = vld [vmem:[%s5 + $0x78] sm:$0xf]
  %v606 = vld [vmem:[%s5 + $0x7c] sm:$0xf]
  %v607 = vld [vmem:[%s5 + $0x80] sm:$0xf]
  %v608 = vld [vmem:[%s5 + $0x84] sm:$0xf]
  %v609 = vld [vmem:[%s5 + $0x88] sm:$0xf]
  %v610 = vld [vmem:[%s5 + $0x8c] sm:$0xf]
  %v611 = vld [vmem:[%s5 + $0x90] sm:$0xf]
  %v612 = vld [vmem:[%s5 + $0x94] sm:$0xf]
  %v613 = vld [vmem:[%s5 + $0x98] sm:$0xf]
  %v614 = vld [vmem:[%s5 + $0x9c] sm:$0xf]
  %v615 = vld [vmem:[%s5 + $0xa0] sm:$0xf]
  %v616 = vld [vmem:[%s5 + $0xa4] sm:$0xf]
  %v617 = vld [vmem:[%s5 + $0xa8] sm:$0xf]
  %v618 = vld [vmem:[%s5 + $0xac] sm:$0xf]
  %v619 = vld [vmem:[%s5 + $0xb0] sm:$0xf]
  %v620 = vld [vmem:[%s5 + $0xb4] sm:$0xf]
  %v621 = vld [vmem:[%s5 + $0xb8] sm:$0xf]
  %v622 = vld [vmem:[%s5 + $0xbc] sm:$0xf]
  %v623 = vld [vmem:[%s5 + $0xc0] sm:$0xf]
  %v624 = vld [vmem:[%s5 + $0xc4] sm:$0xf]
  %v625 = vld [vmem:[%s5 + $0xc8] sm:$0xf]
  %v626 = vld [vmem:[%s5 + $0xcc] sm:$0xf]
  %v627 = vld [vmem:[%s5 + $0xd0] sm:$0xf]
  %v628 = vld [vmem:[%s5 + $0xd4] sm:$0xf]
  %v629 = vld [vmem:[%s5 + $0xd8] sm:$0xf]
  %v630 = vld [vmem:[%s5 + $0xdc] sm:$0xf]
  %v631 = vld [vmem:[%s5 + $0xe0] sm:$0xf]
  %v632 = vld [vmem:[%s5 + $0xe4] sm:$0xf]
  %v633 = vld [vmem:[%s5 + $0xe8] sm:$0xf]
  %v634 = vld [vmem:[%s5 + $0xec] sm:$0xf]
  %v635 = vld [vmem:[%s5 + $0xf0] sm:$0xf]
  %v636 = vld [vmem:[%s5 + $0xf4] sm:$0xf]
  %v637 = vld [vmem:[%s5 + $0xf8] sm:$0xf]
  %v638 = vld [vmem:[%s5 + $0xfc] sm:$0xf]
  %v703 = vunpack.c.l.b16 %v575
  %v704 = vunpack.c.l.b16 %v576
  %v705 = vunpack.c.l.b16 %v577
  %v706 = vunpack.c.l.b16 %v578
  %v707 = vunpack.c.l.b16 %v579
  %v708 = vunpack.c.l.b16 %v580
  %v709 = vunpack.c.l.b16 %v581
  %v710 = vunpack.c.l.b16 %v582
  %v711 = vunpack.c.l.b16 %v583
  %v712 = vunpack.c.l.b16 %v584
  %v713 = vunpack.c.l.b16 %v585
  %v714 = vunpack.c.l.b16 %v586
  %v715 = vunpack.c.l.b16 %v587
  %v716 = vunpack.c.l.b16 %v588
  %v717 = vunpack.c.l.b16 %v589
  %v718 = vunpack.c.l.b16 %v590
  %v719 = vunpack.c.l.b16 %v591
  %v720 = vunpack.c.l.b16 %v592
  %v721 = vunpack.c.l.b16 %v593
  %v722 = vunpack.c.l.b16 %v594
  %v723 = vunpack.c.l.b16 %v595
  %v724 = vunpack.c.l.b16 %v596
  %v725 = vunpack.c.l.b16 %v597
  %v726 = vunpack.c.l.b16 %v598
  %v727 = vunpack.c.l.b16 %v599
  %v728 = vunpack.c.l.b16 %v600
  %v729 = vunpack.c.l.b16 %v601
  %v730 = vunpack.c.l.b16 %v602
  %v731 = vunpack.c.l.b16 %v603
  %v732 = vunpack.c.l.b16 %v604
  %v733 = vunpack.c.l.b16 %v605
  %v734 = vunpack.c.l.b16 %v606
  %v735 = vunpack.c.l.b16 %v607
  %v736 = vunpack.c.l.b16 %v608
  %v737 = vunpack.c.l.b16 %v609
  %v738 = vunpack.c.l.b16 %v610
  %v739 = vunpack.c.l.b16 %v611
  %v740 = vunpack.c.l.b16 %v612
  %v741 = vunpack.c.l.b16 %v613
  %v742 = vunpack.c.l.b16 %v614
  %v743 = vunpack.c.l.b16 %v615
  %v744 = vunpack.c.l.b16 %v616
  %v745 = vunpack.c.l.b16 %v617
  %v746 = vunpack.c.l.b16 %v618
  %v747 = vunpack.c.l.b16 %v619
  %v748 = vunpack.c.l.b16 %v620
  %v749 = vunpack.c.l.b16 %v621
  %v750 = vunpack.c.l.b16 %v622
  %v751 = vunpack.c.l.b16 %v623
  %v752 = vunpack.c.l.b16 %v624
  %v753 = vunpack.c.l.b16 %v625
  %v754 = vunpack.c.l.b16 %v626
  %v755 = vunpack.c.l.b16 %v627
  %v756 = vunpack.c.l.b16 %v628
  %v757 = vunpack.c.l.b16 %v629
  %v758 = vunpack.c.l.b16 %v630
  %v759 = vunpack.c.l.b16 %v631
  %v760 = vunpack.c.l.b16 %v632
  %v761 = vunpack.c.l.b16 %v633
  %v762 = vunpack.c.l.b16 %v634
  %v763 = vunpack.c.l.b16 %v635
  %v764 = vunpack.c.l.b16 %v636
  %v765 = vunpack.c.l.b16 %v637
  %v766 = vunpack.c.l.b16 %v638
  %v767 = vpack.c.b16 %v704, %v703
  %v768 = vpack.c.b16 %v706, %v705
  %v769 = vpack.c.b16 %v708, %v707
  %v770 = vpack.c.b16 %v710, %v709
  %v771 = vpack.c.b16 %v712, %v711
  %v772 = vpack.c.b16 %v714, %v713
  %v773 = vpack.c.b16 %v716, %v715
  %v774 = vpack.c.b16 %v718, %v717
  %v775 = vpack.c.b16 %v720, %v719
  %v776 = vpack.c.b16 %v722, %v721
  %v777 = vpack.c.b16 %v724, %v723
  %v778 = vpack.c.b16 %v726, %v725
  %v779 = vpack.c.b16 %v728, %v727
  %v780 = vpack.c.b16 %v730, %v729
  %v781 = vpack.c.b16 %v732, %v731
  %v782 = vpack.c.b16 %v734, %v733
  %v783 = vpack.c.b16 %v736, %v735
  %v784 = vpack.c.b16 %v738, %v737
  %v785 = vpack.c.b16 %v740, %v739
  %v786 = vpack.c.b16 %v742, %v741
  %v787 = vpack.c.b16 %v744, %v743
  %v788 = vpack.c.b16 %v746, %v745
  %v789 = vpack.c.b16 %v748, %v747
  %v790 = vpack.c.b16 %v750, %v749
  %v791 = vpack.c.b16 %v752, %v751
  %v792 = vpack.c.b16 %v754, %v753
  %v793 = vpack.c.b16 %v756, %v755
  %v794 = vpack.c.b16 %v758, %v757
  %v795 = vpack.c.b16 %v760, %v759
  %v796 = vpack.c.b16 %v762, %v761
  %v797 = vpack.c.b16 %v764, %v763
  %v798 = vpack.c.b16 %v766, %v765
  %831 = vmatprep.subr.bf16.mxu0 0
  %832 = vmatpush1.bf16.msra.mxu0 %v767
  %833 = vmatprep.subr.bf16.mxu0 0
  %834 = vmatpush1.bf16.msra.mxu0 %v768
  %835 = vmatprep.subr.bf16.mxu0 0
  %836 = vmatpush1.bf16.msra.mxu0 %v769
  %837 = vmatprep.subr.bf16.mxu0 0
  %838 = vmatpush1.bf16.msra.mxu0 %v770
  %839 = vmatprep.subr.bf16.mxu0 0
  %840 = vmatpush1.bf16.msra.mxu0 %v771
  %841 = vmatprep.subr.bf16.mxu0 0
  %842 = vmatpush1.bf16.msra.mxu0 %v772
  %843 = vmatprep.subr.bf16.mxu0 0
  %844 = vmatpush1.bf16.msra.mxu0 %v773
  %845 = vmatprep.subr.bf16.mxu0 0
  %846 = vmatpush1.bf16.msra.mxu0 %v774
  %847 = vmatprep.subr.bf16.mxu0 0
  %848 = vmatpush1.bf16.msra.mxu0 %v775
  %849 = vmatprep.subr.bf16.mxu0 0
  %850 = vmatpush1.bf16.msra.mxu0 %v776
  %851 = vmatprep.subr.bf16.mxu0 0
  %852 = vmatpush1.bf16.msra.mxu0 %v777
  %853 = vmatprep.subr.bf16.mxu0 0
  %854 = vmatpush1.bf16.msra.mxu0 %v778
  %855 = vmatprep.subr.bf16.mxu0 0
  %856 = vmatpush1.bf16.msra.mxu0 %v779
  %857 = vmatprep.subr.bf16.mxu0 0
  %858 = vmatpush1.bf16.msra.mxu0 %v780
  %859 = vmatprep.subr.bf16.mxu0 0
  %860 = vmatpush1.bf16.msra.mxu0 %v781
  %861 = vmatprep.subr.bf16.mxu0 0
  %862 = vmatpush1.bf16.msra.mxu0 %v782
  %863 = vmatprep.mubr.bf16.mxu0 %v572
  %864 = vmatmul.mubr.bf16.gmra.mrb[0].mxu0 %v571
  %v865 = vpop.f32.mrb[0].mxu0
  %v866 = vadd.f32 0.0, %v865
  %v867 = vpop.f32.mrb[0].mxu0
  %v868 = vpop.f32.mrb[0].mxu0
  %v869 = vpop.f32.mrb[0].mxu0
  %870 = vdwg.mxu0
  %871 = vmatprep.subr.bf16.mxu0 0
  %872 = vmatpush1.bf16.msra.mxu0 %v783
  %873 = vmatprep.subr.bf16.mxu0 0
  %874 = vmatpush1.bf16.msra.mxu0 %v784
  %875 = vmatprep.subr.bf16.mxu0 0
  %876 = vmatpush1.bf16.msra.mxu0 %v785
  %877 = vmatprep.subr.bf16.mxu0 0
  %878 = vmatpush1.bf16.msra.mxu0 %v786
  %879 = vmatprep.subr.bf16.mxu0 0
  %880 = vmatpush1.bf16.msra.mxu0 %v787
  %881 = vmatprep.subr.bf16.mxu0 0
  %882 = vmatpush1.bf16.msra.mxu0 %v788
  %883 = vmatprep.subr.bf16.mxu0 0
  %884 = vmatpush1.bf16.msra.mxu0 %v789
  %885 = vmatprep.subr.bf16.mxu0 0
  %886 = vmatpush1.bf16.msra.mxu0 %v790
  %887 = vmatprep.subr.bf16.mxu0 0
  %888 = vmatpush1.bf16.msra.mxu0 %v791
  %889 = vmatprep.subr.bf16.mxu0 0
  %890 = vmatpush1.bf16.msra.mxu0 %v792
  %891 = vmatprep.subr.bf16.mxu0 0
  %892 = vmatpush1.bf16.msra.mxu0 %v793
  %893 = vmatprep.subr.bf16.mxu0 0
  %894 = vmatpush1.bf16.msra.mxu0 %v794
  %895 = vmatprep.subr.bf16.mxu0 0
  %896 = vmatpush1.bf16.msra.mxu0 %v795
  %897 = vmatprep.subr.bf16.mxu0 0
  %898 = vmatpush1.bf16.msra.mxu0 %v796
  %899 = vmatprep.subr.bf16.mxu0 0
  %900 = vmatpush1.bf16.msra.mxu0 %v797
  %901 = vmatprep.subr.bf16.mxu0 0
  %902 = vmatpush1.bf16.msra.mxu0 %v798
  %903 = vmatprep.mubr.bf16.mxu0 %v574
  %904 = vmatmul.mubr.bf16.gmra.mrb[0].mxu0 %v573
  %v905 = vpop.f32.mrb[0].mxu0
  %v906 = vadd.f32 %v866, %v905
  %v907 = vpop.f32.mrb[0].mxu0
  %v908 = vpop.f32.mrb[0].mxu0
  %v909 = vpop.f32.mrb[0].mxu0
  %910 = vdwg.mxu0
  %v911 = vpack.c.bf16 %v906, %v906
  %v912 = vld [vmem:[%s6] sm:$0xff]
  %v913 = vld [vmem:[%s6 + $0x8] sm:$0xff]
  %v916 = vunpack.c.l.b16 %v912
  %v917 = vunpack.c.h.b16 %v912
  %v918 = vunpack.c.l.b16 %v913
  %v919 = vunpack.c.h.b16 %v913
  %v920 = vpack.c.b16 %v916, %v916
  %v921 = vpack.c.b16 %v917, %v917
  %v922 = vpack.c.b16 %v918, %v918
  %v923 = vpack.c.b16 %v919, %v919
  %vm924 = vcmask 64512
  %v926 = vsel %vm924, %v911, 0
  %v929 = vsel %vm202, %v920, 0
  %v932 = vsel %vm202, %v921, 0
  %v935 = vsel %vm202, %v922, 0
  %v938 = vsel %vm202, %v923, 0
  %940 = vmatprep.subr.bf16.mxu0 %v932
  %941 = vmatpush1.bf16.msra.mxu0 %v929
  %942 = vmatprep.subr.bf16.mxu0 0
  %943 = vmatpush1.bf16.msra.mxu0 0
  %944 = vmatprep.subr.bf16.mxu0 0
  %945 = vmatpush1.bf16.msra.mxu0 0
  %946 = vmatprep.subr.bf16.mxu0 0
  %947 = vmatpush1.bf16.msra.mxu0 0
  %948 = vmatprep.subr.bf16.mxu0 0
  %949 = vmatpush1.bf16.msra.mxu0 0
  %950 = vmatprep.subr.bf16.mxu0 0
  %951 = vmatpush1.bf16.msra.mxu0 0
  %952 = vmatprep.subr.bf16.mxu0 0
  %953 = vmatpush1.bf16.msra.mxu0 0
  %954 = vmatprep.subr.bf16.mxu0 0
  %955 = vmatpush1.bf16.msra.mxu0 0
  %956 = vmatprep.subr.bf16.mxu0 0
  %957 = vmatpush1.bf16.msra.mxu0 0
  %958 = vmatprep.subr.bf16.mxu0 0
  %959 = vmatpush1.bf16.msra.mxu0 0
  %960 = vmatprep.subr.bf16.mxu0 0
  %961 = vmatpush1.bf16.msra.mxu0 0
  %962 = vmatprep.subr.bf16.mxu0 0
  %963 = vmatpush1.bf16.msra.mxu0 0
  %964 = vmatprep.subr.bf16.mxu0 0
  %965 = vmatpush1.bf16.msra.mxu0 0
  %966 = vmatprep.subr.bf16.mxu0 0
  %967 = vmatpush1.bf16.msra.mxu0 0
  %968 = vmatprep.subr.bf16.mxu0 0
  %969 = vmatpush1.bf16.msra.mxu0 0
  %970 = vmatprep.subr.bf16.mxu0 0
  %971 = vmatpush1.bf16.msra.mxu0 0
  %972 = vmatprep.mubr.bf16.mxu0 0
  %973 = vmatmul.mubr.bf16.gmra.mrb[0].mxu0 %v926
  %v974 = vpop.f32.mrb[0].mxu0
  %v975 = vadd.f32 0.0, %v974
  %v976 = vpop.f32.mrb[0].mxu0
  %v977 = vadd.f32 0.0, %v976
  %v978 = vpop.f32.mrb[0].mxu0
  %v979 = vpop.f32.mrb[0].mxu0
  %980 = vdwg.mxu0
  %981 = vmatprep.subr.bf16.mxu0 %v938
  %982 = vmatpush1.bf16.msra.mxu0 %v935
  %983 = vmatprep.subr.bf16.mxu0 0
  %984 = vmatpush1.bf16.msra.mxu0 0
  %985 = vmatprep.subr.bf16.mxu0 0
  %986 = vmatpush1.bf16.msra.mxu0 0
  %987 = vmatprep.subr.bf16.mxu0 0
  %988 = vmatpush1.bf16.msra.mxu0 0
  %989 = vmatprep.subr.bf16.mxu0 0
  %990 = vmatpush1.bf16.msra.mxu0 0
  %991 = vmatprep.subr.bf16.mxu0 0
  %992 = vmatpush1.bf16.msra.mxu0 0
  %993 = vmatprep.subr.bf16.mxu0 0
  %994 = vmatpush1.bf16.msra.mxu0 0
  %995 = vmatprep.subr.bf16.mxu0 0
  %996 = vmatpush1.bf16.msra.mxu0 0
  %997 = vmatprep.subr.bf16.mxu0 0
  %998 = vmatpush1.bf16.msra.mxu0 0
  %999 = vmatprep.subr.bf16.mxu0 0
  %1000 = vmatpush1.bf16.msra.mxu0 0
  %1001 = vmatprep.subr.bf16.mxu0 0
  %1002 = vmatpush1.bf16.msra.mxu0 0
  %1003 = vmatprep.subr.bf16.mxu0 0
  %1004 = vmatpush1.bf16.msra.mxu0 0
  %1005 = vmatprep.subr.bf16.mxu0 0
  %1006 = vmatpush1.bf16.msra.mxu0 0
  %1007 = vmatprep.subr.bf16.mxu0 0
  %1008 = vmatpush1.bf16.msra.mxu0 0
  %1009 = vmatprep.subr.bf16.mxu0 0
  %1010 = vmatpush1.bf16.msra.mxu0 0
  %1011 = vmatprep.subr.bf16.mxu0 0
  %1012 = vmatpush1.bf16.msra.mxu0 0
  %1013 = vmatprep.mubr.bf16.mxu0 0
  %1014 = vmatmul.mubr.bf16.gmra.mrb[0].mxu0 %v926
  %v1015 = vpop.f32.mrb[0].mxu0
  %v1016 = vadd.f32 0.0, %v1015
  %v1017 = vpop.f32.mrb[0].mxu0
  %v1018 = vadd.f32 0.0, %v1017
  %v1019 = vpop.f32.mrb[0].mxu0
  %v1020 = vpop.f32.mrb[0].mxu0
  %1021 = vdwg.mxu0
  %v1022 = vlaneseq
  %v1023 = vshrl.u32 %v1022, 7
  %v1024 = vsub.s32 0, %v1023
  %v1025 = vrot.slane %v975, %v1024
  %v1026 = vlaneseq
  %v1027 = vshrl.u32 %v1026, 7
  %v1028 = vsub.s32 0, %v1027
  %v1029 = vrot.slane %v977, %v1028
  %v1030 = vlaneseq
  %v1031 = vshrl.u32 %v1030, 7
  %v1032 = vsub.s32 0, %v1031
  %v1033 = vrot.slane %v1016, %v1032
  %v1034 = vlaneseq
  %v1035 = vshrl.u32 %v1034, 7
  %v1036 = vsub.s32 0, %v1035
  %v1037 = vrot.slane %v1018, %v1036
  %v1038 = vsub.f32 %v535, %v1025
  %v1039 = vsub.f32 %v536, %v1029
  %v1040 = vsub.f32 %v537, %v1033
  %v1041 = vsub.f32 %v538, %v1037
  %v1042 = vmul.f32 %v1038, %v1038
  %v1043 = vmul.f32 %v1039, %v1039
  %v1044 = vmul.f32 %v1040, %v1040
  %v1045 = vmul.f32 %v1041, %v1041
  %v1046 = vsel %vm202, %v1042, 0.0
  %v1047 = vrot.slane %v1046, 4
  %v1048 = vadd.f32 %v1046, %v1047
  %v1049 = vrot.slane %v1048, 2
  %v1050 = vadd.f32 %v1048, %v1049
  %v1051 = vrot.slane %v1050, 1
  %v1052 = vadd.f32 %v1050, %v1051
  %v1053 = vsel %vm202, %v1043, 0.0
  %v1054 = vrot.slane %v1053, 4
  %v1055 = vadd.f32 %v1053, %v1054
  %v1056 = vrot.slane %v1055, 2
  %v1057 = vadd.f32 %v1055, %v1056
  %v1058 = vrot.slane %v1057, 1
  %v1059 = vadd.f32 %v1057, %v1058
  %v1060 = vsel %vm202, %v1044, 0.0
  %v1061 = vrot.slane %v1060, 4
  %v1062 = vadd.f32 %v1060, %v1061
  %v1063 = vrot.slane %v1062, 2
  %v1064 = vadd.f32 %v1062, %v1063
  %v1065 = vrot.slane %v1064, 1
  %v1066 = vadd.f32 %v1064, %v1065
  %v1067 = vsel %vm202, %v1045, 0.0
  %v1068 = vrot.slane %v1067, 4
  %v1069 = vadd.f32 %v1067, %v1068
  %v1070 = vrot.slane %v1069, 2
  %v1071 = vadd.f32 %v1069, %v1070
  %v1072 = vrot.slane %v1071, 1
  %v1073 = vadd.f32 %v1071, %v1072
  %v1074 = vmul.f32 %v1052, %v102
  %v1075 = vmul.f32 %v1059, %v102
  %v1076 = vmul.f32 %v1066, %v102
  %v1077 = vmul.f32 %v1073, %v102
  %v1078 = vpack.c.bf16 %v1074, %v1074
  %v1079 = vpack.c.bf16 %v1075, %v1075
  %v1080 = vpack.c.bf16 %v1076, %v1076
  %v1081 = vpack.c.bf16 %v1077, %v1077
  %1082 = vmatprep.subr.bf16.mxu0 0
  %1083 = vmatpush1.bf16.msra.mxu0 %v767
  %1084 = vmatprep.subr.bf16.mxu0 0
  %1085 = vmatpush1.bf16.msra.mxu0 %v768
  %1086 = vmatprep.subr.bf16.mxu0 0
  %1087 = vmatpush1.bf16.msra.mxu0 %v769
  %1088 = vmatprep.subr.bf16.mxu0 0
  %1089 = vmatpush1.bf16.msra.mxu0 %v770
  %1090 = vmatprep.subr.bf16.mxu0 0
  %1091 = vmatpush1.bf16.msra.mxu0 %v771
  %1092 = vmatprep.subr.bf16.mxu0 0
  %1093 = vmatpush1.bf16.msra.mxu0 %v772
  %1094 = vmatprep.subr.bf16.mxu0 0
  %1095 = vmatpush1.bf16.msra.mxu0 %v773
  %1096 = vmatprep.subr.bf16.mxu0 0
  %1097 = vmatpush1.bf16.msra.mxu0 %v774
  %1098 = vmatprep.subr.bf16.mxu0 0
  %1099 = vmatpush1.bf16.msra.mxu0 %v775
  %1100 = vmatprep.subr.bf16.mxu0 0
  %1101 = vmatpush1.bf16.msra.mxu0 %v776
  %1102 = vmatprep.subr.bf16.mxu0 0
  %1103 = vmatpush1.bf16.msra.mxu0 %v777
  %1104 = vmatprep.subr.bf16.mxu0 0
  %1105 = vmatpush1.bf16.msra.mxu0 %v778
  %1106 = vmatprep.subr.bf16.mxu0 0
  %1107 = vmatpush1.bf16.msra.mxu0 %v779
  %1108 = vmatprep.subr.bf16.mxu0 0
  %1109 = vmatpush1.bf16.msra.mxu0 %v780
  %1110 = vmatprep.subr.bf16.mxu0 0
  %1111 = vmatpush1.bf16.msra.mxu0 %v781
  %1112 = vmatprep.subr.bf16.mxu0 0
  %1113 = vmatpush1.bf16.msra.mxu0 %v782
  %1114 = vmatprep.mubr.bf16.mxu0 %v1079
  %1115 = vmatmul.mubr.bf16.gmra.mrb[0].mxu0 %v1078
  %v1116 = vpop.f32.mrb[0].mxu0
  %v1117 = vadd.f32 0.0, %v1116
  %v1118 = vpop.f32.mrb[0].mxu0
  %v1119 = vpop.f32.mrb[0].mxu0
  %v1120 = vpop.f32.mrb[0].mxu0
  %1121 = vdwg.mxu0
  %1122 = vmatprep.subr.bf16.mxu0 0
  %1123 = vmatpush1.bf16.msra.mxu0 %v783
  %1124 = vmatprep.subr.bf16.mxu0 0
  %1125 = vmatpush1.bf16.msra.mxu0 %v784
  %1126 = vmatprep.subr.bf16.mxu0 0
  %1127 = vmatpush1.bf16.msra.mxu0 %v785
  %1128 = vmatprep.subr.bf16.mxu0 0
  %1129 = vmatpush1.bf16.msra.mxu0 %v786
  %1130 = vmatprep.subr.bf16.mxu0 0
  %1131 = vmatpush1.bf16.msra.mxu0 %v787
  %1132 = vmatprep.subr.bf16.mxu0 0
  %1133 = vmatpush1.bf16.msra.mxu0 %v788
  %1134 = vmatprep.subr.bf16.mxu0 0
  %1135 = vmatpush1.bf16.msra.mxu0 %v789
  %1136 = vmatprep.subr.bf16.mxu0 0
  %1137 = vmatpush1.bf16.msra.mxu0 %v790
  %1138 = vmatprep.subr.bf16.mxu0 0
  %1139 = vmatpush1.bf16.msra.mxu0 %v791
  %1140 = vmatprep.subr.bf16.mxu0 0
  %1141 = vmatpush1.bf16.msra.mxu0 %v792
  %1142 = vmatprep.subr.bf16.mxu0 0
  %1143 = vmatpush1.bf16.msra.mxu0 %v793
  %1144 = vmatprep.subr.bf16.mxu0 0
  %1145 = vmatpush1.bf16.msra.mxu0 %v794
  %1146 = vmatprep.subr.bf16.mxu0 0
  %1147 = vmatpush1.bf16.msra.mxu0 %v795
  %1148 = vmatprep.subr.bf16.mxu0 0
  %1149 = vmatpush1.bf16.msra.mxu0 %v796
  %1150 = vmatprep.subr.bf16.mxu0 0
  %1151 = vmatpush1.bf16.msra.mxu0 %v797
  %1152 = vmatprep.subr.bf16.mxu0 0
  %1153 = vmatpush1.bf16.msra.mxu0 %v798
  %1154 = vmatprep.mubr.bf16.mxu0 %v1081
  %1155 = vmatmul.mubr.bf16.gmra.mrb[0].mxu0 %v1080
  %v1156 = vpop.f32.mrb[0].mxu0
  %v1157 = vadd.f32 %v1117, %v1156
  %v1158 = vpop.f32.mrb[0].mxu0
  %v1159 = vpop.f32.mrb[0].mxu0
  %v1160 = vpop.f32.mrb[0].mxu0
  %1161 = vdwg.mxu0
  %v1162 = vpack.c.bf16 %v1157, %v1157
  %v1163 = vld [vmem:[%s7 + $0xa] sm:$0xf]
  %v1165 = vlaneseq
  %v1166 = vshrl.u32 %v1165, 7
  %v1167 = vsub.s32 0, %v1166
  %v1168 = vrot.slane %v1163, %v1167
  %v1169 = vlaneseq
  %v1170 = vshrl.u32 %v1169, 7
  %v1171 = vsub.s32 1, %v1170
  %v1172 = vrot.slane %v1163, %v1171
  %v1173 = vlaneseq
  %v1174 = vshrl.u32 %v1173, 7
  %v1175 = vsub.s32 2, %v1174
  %v1176 = vrot.slane %v1163, %v1175
  %v1177 = vlaneseq
  %v1178 = vshrl.u32 %v1177, 7
  %v1179 = vsub.s32 3, %v1178
  %v1180 = vrot.slane %v1163, %v1179
  %v1185 = vmul.f32 %v1168, %v1038
  %v1186 = vmul.f32 %v1172, %v1039
  %v1187 = vmul.f32 %v1176, %v1040
  %v1188 = vmul.f32 %v1180, %v1041
  %v1190 = vsel %vm924, %v1162, 0
  %1192 = vmatprep.subr.bf16.mxu0 %v932
  %1193 = vmatpush1.bf16.msra.mxu0 %v929
  %1194 = vmatprep.subr.bf16.mxu0 0
  %1195 = vmatpush1.bf16.msra.mxu0 0
  %1196 = vmatprep.subr.bf16.mxu0 0
  %1197 = vmatpush1.bf16.msra.mxu0 0
  %1198 = vmatprep.subr.bf16.mxu0 0
  %1199 = vmatpush1.bf16.msra.mxu0 0
  %1200 = vmatprep.subr.bf16.mxu0 0
  %1201 = vmatpush1.bf16.msra.mxu0 0
  %1202 = vmatprep.subr.bf16.mxu0 0
  %1203 = vmatpush1.bf16.msra.mxu0 0
  %1204 = vmatprep.subr.bf16.mxu0 0
  %1205 = vmatpush1.bf16.msra.mxu0 0
  %1206 = vmatprep.subr.bf16.mxu0 0
  %1207 = vmatpush1.bf16.msra.mxu0 0
  %1208 = vmatprep.subr.bf16.mxu0 0
  %1209 = vmatpush1.bf16.msra.mxu0 0
  %1210 = vmatprep.subr.bf16.mxu0 0
  %1211 = vmatpush1.bf16.msra.mxu0 0
  %1212 = vmatprep.subr.bf16.mxu0 0
  %1213 = vmatpush1.bf16.msra.mxu0 0
  %1214 = vmatprep.subr.bf16.mxu0 0
  %1215 = vmatpush1.bf16.msra.mxu0 0
  %1216 = vmatprep.subr.bf16.mxu0 0
  %1217 = vmatpush1.bf16.msra.mxu0 0
  %1218 = vmatprep.subr.bf16.mxu0 0
  %1219 = vmatpush1.bf16.msra.mxu0 0
  %1220 = vmatprep.subr.bf16.mxu0 0
  %1221 = vmatpush1.bf16.msra.mxu0 0
  %1222 = vmatprep.subr.bf16.mxu0 0
  %1223 = vmatpush1.bf16.msra.mxu0 0
  %1224 = vmatprep.mubr.bf16.mxu0 0
  %1225 = vmatmul.mubr.bf16.gmra.mrb[0].mxu0 %v1190
  %v1226 = vpop.f32.mrb[0].mxu0
  %v1227 = vadd.f32 1e-05, %v1226
  %v1228 = vpop.f32.mrb[0].mxu0
  %v1229 = vadd.f32 1e-05, %v1228
  %v1230 = vpop.f32.mrb[0].mxu0
  %v1231 = vpop.f32.mrb[0].mxu0
  %1232 = vdwg.mxu0
  %1233 = vmatprep.subr.bf16.mxu0 %v938
  %1234 = vmatpush1.bf16.msra.mxu0 %v935
  %1235 = vmatprep.subr.bf16.mxu0 0
  %1236 = vmatpush1.bf16.msra.mxu0 0
  %1237 = vmatprep.subr.bf16.mxu0 0
  %1238 = vmatpush1.bf16.msra.mxu0 0
  %1239 = vmatprep.subr.bf16.mxu0 0
  %1240 = vmatpush1.bf16.msra.mxu0 0
  %1241 = vmatprep.subr.bf16.mxu0 0
  %1242 = vmatpush1.bf16.msra.mxu0 0
  %1243 = vmatprep.subr.bf16.mxu0 0
  %1244 = vmatpush1.bf16.msra.mxu0 0
  %1245 = vmatprep.subr.bf16.mxu0 0
  %1246 = vmatpush1.bf16.msra.mxu0 0
  %1247 = vmatprep.subr.bf16.mxu0 0
  %1248 = vmatpush1.bf16.msra.mxu0 0
  %1249 = vmatprep.subr.bf16.mxu0 0
  %1250 = vmatpush1.bf16.msra.mxu0 0
  %1251 = vmatprep.subr.bf16.mxu0 0
  %1252 = vmatpush1.bf16.msra.mxu0 0
  %1253 = vmatprep.subr.bf16.mxu0 0
  %1254 = vmatpush1.bf16.msra.mxu0 0
  %1255 = vmatprep.subr.bf16.mxu0 0
  %1256 = vmatpush1.bf16.msra.mxu0 0
  %1257 = vmatprep.subr.bf16.mxu0 0
  %1258 = vmatpush1.bf16.msra.mxu0 0
  %1259 = vmatprep.subr.bf16.mxu0 0
  %1260 = vmatpush1.bf16.msra.mxu0 0
  %1261 = vmatprep.subr.bf16.mxu0 0
  %1262 = vmatpush1.bf16.msra.mxu0 0
  %1263 = vmatprep.subr.bf16.mxu0 0
  %1264 = vmatpush1.bf16.msra.mxu0 0
  %1265 = vmatprep.mubr.bf16.mxu0 0
  %1266 = vmatmul.mubr.bf16.gmra.mrb[0].mxu0 %v1190
  %v1267 = vpop.f32.mrb[0].mxu0
  %v1268 = vadd.f32 1e-05, %v1267
  %v1269 = vpop.f32.mrb[0].mxu0
  %v1270 = vadd.f32 1e-05, %v1269
  %v1271 = vpop.f32.mrb[0].mxu0
  %v1272 = vpop.f32.mrb[0].mxu0
  %1273 = vdwg.mxu0
  %v1274 = vrsqrt.pop %v1227
  %v1275 = vrsqrt.pop %v1229
  %v1276 = vrsqrt.pop %v1268
  %v1277 = vrsqrt.pop %v1270
  %v1278 = vlaneseq
  %v1279 = vshrl.u32 %v1278, 7
  %v1280 = vsub.s32 0, %v1279
  %v1281 = vrot.slane %v1274, %v1280
  %v1282 = vlaneseq
  %v1283 = vshrl.u32 %v1282, 7
  %v1284 = vsub.s32 0, %v1283
  %v1285 = vrot.slane %v1275, %v1284
  %v1286 = vlaneseq
  %v1287 = vshrl.u32 %v1286, 7
  %v1288 = vsub.s32 0, %v1287
  %v1289 = vrot.slane %v1276, %v1288
  %v1290 = vlaneseq
  %v1291 = vshrl.u32 %v1290, 7
  %v1292 = vsub.s32 0, %v1291
  %v1293 = vrot.slane %v1277, %v1292
  %v1294 = vmul.f32 %v1185, %v1281
  %v1295 = vmul.f32 %v1186, %v1285
  %v1296 = vmul.f32 %v1187, %v1289
  %v1297 = vmul.f32 %v1188, %v1293
  %v1298 = vld [vmem:[%s7 + $0xe] sm:$0xf]
  %v1300 = vlaneseq
  %v1301 = vshrl.u32 %v1300, 7
  %v1302 = vsub.s32 0, %v1301
  %v1303 = vrot.slane %v1298, %v1302
  %v1304 = vlaneseq
  %v1305 = vshrl.u32 %v1304, 7
  %v1306 = vsub.s32 1, %v1305
  %v1307 = vrot.slane %v1298, %v1306
  %v1308 = vlaneseq
  %v1309 = vshrl.u32 %v1308, 7
  %v1310 = vsub.s32 2, %v1309
  %v1311 = vrot.slane %v1298, %v1310
  %v1312 = vlaneseq
  %v1313 = vshrl.u32 %v1312, 7
  %v1314 = vsub.s32 3, %v1313
  %v1315 = vrot.slane %v1298, %v1314
  %v1320 = vadd.f32 %v1294, %v1303
  %v1321 = vadd.f32 %v1295, %v1307
  %v1322 = vadd.f32 %v1296, %v1311
  %v1323 = vadd.f32 %v1297, %v1315
  %v1324 = vpack.c.bf16 %v1320, %v1320
  %v1325 = vpack.c.bf16 %v1321, %v1321
  %v1326 = vpack.c.bf16 %v1322, %v1322
  %v1327 = vpack.c.bf16 %v1323, %v1323
  %v1328 = vld [vmem:[%s4] sm:$0xff]
  %v1329 = vld [vmem:[%s4 + $0x8] sm:$0xff]
  %v1330 = vld [vmem:[%s4 + $0x10] sm:$0xff]
  %v1331 = vld [vmem:[%s4 + $0x18] sm:$0xff]
  %v1332 = vld [vmem:[%s4 + $0x20] sm:$0xff]
  %v1333 = vld [vmem:[%s4 + $0x28] sm:$0xff]
  %v1334 = vld [vmem:[%s4 + $0x30] sm:$0xff]
  %v1335 = vld [vmem:[%s4 + $0x38] sm:$0xff]
  %v1336 = vld [vmem:[%s4 + $0x40] sm:$0xff]
  %v1337 = vld [vmem:[%s4 + $0x48] sm:$0xff]
  %v1338 = vld [vmem:[%s4 + $0x50] sm:$0xff]
  %v1339 = vld [vmem:[%s4 + $0x58] sm:$0xff]
  %v1340 = vld [vmem:[%s4 + $0x60] sm:$0xff]
  %v1341 = vld [vmem:[%s4 + $0x68] sm:$0xff]
  %v1342 = vld [vmem:[%s4 + $0x70] sm:$0xff]
  %v1343 = vld [vmem:[%s4 + $0x78] sm:$0xff]
  %v1344 = vld [vmem:[%s4 + $0x80] sm:$0xff]
  %v1345 = vld [vmem:[%s4 + $0x88] sm:$0xff]
  %v1346 = vld [vmem:[%s4 + $0x90] sm:$0xff]
  %v1347 = vld [vmem:[%s4 + $0x98] sm:$0xff]
  %v1348 = vld [vmem:[%s4 + $0xa0] sm:$0xff]
  %v1349 = vld [vmem:[%s4 + $0xa8] sm:$0xff]
  %v1350 = vld [vmem:[%s4 + $0xb0] sm:$0xff]
  %v1351 = vld [vmem:[%s4 + $0xb8] sm:$0xff]
  %v1352 = vld [vmem:[%s4 + $0xc0] sm:$0xff]
  %v1353 = vld [vmem:[%s4 + $0xc8] sm:$0xff]
  %v1354 = vld [vmem:[%s4 + $0xd0] sm:$0xff]
  %v1355 = vld [vmem:[%s4 + $0xd8] sm:$0xff]
  %v1356 = vld [vmem:[%s4 + $0xe0] sm:$0xff]
  %v1357 = vld [vmem:[%s4 + $0xe8] sm:$0xff]
  %v1358 = vld [vmem:[%s4 + $0xf0] sm:$0xff]
  %v1359 = vld [vmem:[%s4 + $0xf8] sm:$0xff]
  %v1360 = vld [vmem:[%s4 + $0x100] sm:$0xff]
  %v1361 = vld [vmem:[%s4 + $0x108] sm:$0xff]
  %v1362 = vld [vmem:[%s4 + $0x110] sm:$0xff]
  %v1363 = vld [vmem:[%s4 + $0x118] sm:$0xff]
  %v1364 = vld [vmem:[%s4 + $0x120] sm:$0xff]
  %v1365 = vld [vmem:[%s4 + $0x128] sm:$0xff]
  %v1366 = vld [vmem:[%s4 + $0x130] sm:$0xff]
  %v1367 = vld [vmem:[%s4 + $0x138] sm:$0xff]
  %v1368 = vld [vmem:[%s4 + $0x140] sm:$0xff]
  %v1369 = vld [vmem:[%s4 + $0x148] sm:$0xff]
  %v1370 = vld [vmem:[%s4 + $0x150] sm:$0xff]
  %v1371 = vld [vmem:[%s4 + $0x158] sm:$0xff]
  %v1372 = vld [vmem:[%s4 + $0x160] sm:$0xff]
  %v1373 = vld [vmem:[%s4 + $0x168] sm:$0xff]
  %v1374 = vld [vmem:[%s4 + $0x170] sm:$0xff]
  %v1375 = vld [vmem:[%s4 + $0x178] sm:$0xff]
  %v1376 = vld [vmem:[%s4 + $0x180] sm:$0xff]
  %v1377 = vld [vmem:[%s4 + $0x188] sm:$0xff]
  %v1378 = vld [vmem:[%s4 + $0x190] sm:$0xff]
  %v1379 = vld [vmem:[%s4 + $0x198] sm:$0xff]
  %v1380 = vld [vmem:[%s4 + $0x1a0] sm:$0xff]
  %v1381 = vld [vmem:[%s4 + $0x1a8] sm:$0xff]
  %v1382 = vld [vmem:[%s4 + $0x1b0] sm:$0xff]
  %v1383 = vld [vmem:[%s4 + $0x1b8] sm:$0xff]
  %v1384 = vld [vmem:[%s4 + $0x1c0] sm:$0xff]
  %v1385 = vld [vmem:[%s4 + $0x1c8] sm:$0xff]
  %v1386 = vld [vmem:[%s4 + $0x1d0] sm:$0xff]
  %v1387 = vld [vmem:[%s4 + $0x1d8] sm:$0xff]
  %v1388 = vld [vmem:[%s4 + $0x1e0] sm:$0xff]
  %v1389 = vld [vmem:[%s4 + $0x1e8] sm:$0xff]
  %v1390 = vld [vmem:[%s4 + $0x1f0] sm:$0xff]
  %v1391 = vld [vmem:[%s4 + $0x1f8] sm:$0xff]
  %v1392 = vld [vmem:[%s7 + $0x12] sm:$0x3]
  %v1394 = vlaneseq
  %v1395 = vshrl.u32 %v1394, 7
  %v1396 = vsub.s32 0, %v1395
  %v1397 = vrot.slane %v1392, %v1396
  %v1398 = vlaneseq
  %v1399 = vshrl.u32 %v1398, 7
  %v1400 = vsub.s32 1, %v1399
  %v1401 = vrot.slane %v1392, %v1400
  %v1468 = vunpack.c.l.b16 %v1328
  %v1469 = vunpack.c.h.b16 %v1328
  %v1470 = vunpack.c.l.b16 %v1329
  %v1471 = vunpack.c.h.b16 %v1329
  %v1472 = vunpack.c.l.b16 %v1330
  %v1473 = vunpack.c.h.b16 %v1330
  %v1474 = vunpack.c.l.b16 %v1331
  %v1475 = vunpack.c.h.b16 %v1331
  %v1476 = vunpack.c.l.b16 %v1332
  %v1477 = vunpack.c.h.b16 %v1332
  %v1478 = vunpack.c.l.b16 %v1333
  %v1479 = vunpack.c.h.b16 %v1333
  %v1480 = vunpack.c.l.b16 %v1334
  %v1481 = vunpack.c.h.b16 %v1334
  %v1482 = vunpack.c.l.b16 %v1335
  %v1483 = vunpack.c.h.b16 %v1335
  %v1484 = vunpack.c.l.b16 %v1336
  %v1485 = vunpack.c.h.b16 %v1336
  %v1486 = vunpack.c.l.b16 %v1337
  %v1487 = vunpack.c.h.b16 %v1337
  %v1488 = vunpack.c.l.b16 %v1338
  %v1489 = vunpack.c.h.b16 %v1338
  %v1490 = vunpack.c.l.b16 %v1339
  %v1491 = vunpack.c.h.b16 %v1339
  %v1492 = vunpack.c.l.b16 %v1340
  %v1493 = vunpack.c.h.b16 %v1340
  %v1494 = vunpack.c.l.b16 %v1341
  %v1495 = vunpack.c.h.b16 %v1341
  %v1496 = vunpack.c.l.b16 %v1342
  %v1497 = vunpack.c.h.b16 %v1342
  %v1498 = vunpack.c.l.b16 %v1343
  %v1499 = vunpack.c.h.b16 %v1343
  %v1500 = vunpack.c.l.b16 %v1344
  %v1501 = vunpack.c.h.b16 %v1344
  %v1502 = vunpack.c.l.b16 %v1345
  %v1503 = vunpack.c.h.b16 %v1345
  %v1504 = vunpack.c.l.b16 %v1346
  %v1505 = vunpack.c.h.b16 %v1346
  %v1506 = vunpack.c.l.b16 %v1347
  %v1507 = vunpack.c.h.b16 %v1347
  %v1508 = vunpack.c.l.b16 %v1348
  %v1509 = vunpack.c.h.b16 %v1348
  %v1510 = vunpack.c.l.b16 %v1349
  %v1511 = vunpack.c.h.b16 %v1349
  %v1512 = vunpack.c.l.b16 %v1350
  %v1513 = vunpack.c.h.b16 %v1350
  %v1514 = vunpack.c.l.b16 %v1351
  %v1515 = vunpack.c.h.b16 %v1351
  %v1516 = vunpack.c.l.b16 %v1352
  %v1517 = vunpack.c.h.b16 %v1352
  %v1518 = vunpack.c.l.b16 %v1353
  %v1519 = vunpack.c.h.b16 %v1353
  %v1520 = vunpack.c.l.b16 %v1354
  %v1521 = vunpack.c.h.b16 %v1354
  %v1522 = vunpack.c.l.b16 %v1355
  %v1523 = vunpack.c.h.b16 %v1355
  %v1524 = vunpack.c.l.b16 %v1356
  %v1525 = vunpack.c.h.b16 %v1356
  %v1526 = vunpack.c.l.b16 %v1357
  %v1527 = vunpack.c.h.b16 %v1357
  %v1528 = vunpack.c.l.b16 %v1358
  %v1529 = vunpack.c.h.b16 %v1358
  %v1530 = vunpack.c.l.b16 %v1359
  %v1531 = vunpack.c.h.b16 %v1359
  %v1532 = vunpack.c.l.b16 %v1360
  %v1533 = vunpack.c.h.b16 %v1360
  %v1534 = vunpack.c.l.b16 %v1361
  %v1535 = vunpack.c.h.b16 %v1361
  %v1536 = vunpack.c.l.b16 %v1362
  %v1537 = vunpack.c.h.b16 %v1362
  %v1538 = vunpack.c.l.b16 %v1363
  %v1539 = vunpack.c.h.b16 %v1363
  %v1540 = vunpack.c.l.b16 %v1364
  %v1541 = vunpack.c.h.b16 %v1364
  %v1542 = vunpack.c.l.b16 %v1365
  %v1543 = vunpack.c.h.b16 %v1365
  %v1544 = vunpack.c.l.b16 %v1366
  %v1545 = vunpack.c.h.b16 %v1366
  %v1546 = vunpack.c.l.b16 %v1367
  %v1547 = vunpack.c.h.b16 %v1367
  %v1548 = vunpack.c.l.b16 %v1368
  %v1549 = vunpack.c.h.b16 %v1368
  %v1550 = vunpack.c.l.b16 %v1369
  %v1551 = vunpack.c.h.b16 %v1369
  %v1552 = vunpack.c.l.b16 %v1370
  %v1553 = vunpack.c.h.b16 %v1370
  %v1554 = vunpack.c.l.b16 %v1371
  %v1555 = vunpack.c.h.b16 %v1371
  %v1556 = vunpack.c.l.b16 %v1372
  %v1557 = vunpack.c.h.b16 %v1372
  %v1558 = vunpack.c.l.b16 %v1373
  %v1559 = vunpack.c.h.b16 %v1373
  %v1560 = vunpack.c.l.b16 %v1374
  %v1561 = vunpack.c.h.b16 %v1374
  %v1562 = vunpack.c.l.b16 %v1375
  %v1563 = vunpack.c.h.b16 %v1375
  %v1564 = vunpack.c.l.b16 %v1376
  %v1565 = vunpack.c.h.b16 %v1376
  %v1566 = vunpack.c.l.b16 %v1377
  %v1567 = vunpack.c.h.b16 %v1377
  %v1568 = vunpack.c.l.b16 %v1378
  %v1569 = vunpack.c.h.b16 %v1378
  %v1570 = vunpack.c.l.b16 %v1379
  %v1571 = vunpack.c.h.b16 %v1379
  %v1572 = vunpack.c.l.b16 %v1380
  %v1573 = vunpack.c.h.b16 %v1380
  %v1574 = vunpack.c.l.b16 %v1381
  %v1575 = vunpack.c.h.b16 %v1381
  %v1576 = vunpack.c.l.b16 %v1382
  %v1577 = vunpack.c.h.b16 %v1382
  %v1578 = vunpack.c.l.b16 %v1383
  %v1579 = vunpack.c.h.b16 %v1383
  %v1580 = vunpack.c.l.b16 %v1384
  %v1581 = vunpack.c.h.b16 %v1384
  %v1582 = vunpack.c.l.b16 %v1385
  %v1583 = vunpack.c.h.b16 %v1385
  %v1584 = vunpack.c.l.b16 %v1386
  %v1585 = vunpack.c.h.b16 %v1386
  %v1586 = vunpack.c.l.b16 %v1387
  %v1587 = vunpack.c.h.b16 %v1387
  %v1588 = vunpack.c.l.b16 %v1388
  %v1589 = vunpack.c.h.b16 %v1388
  %v1590 = vunpack.c.l.b16 %v1389
  %v1591 = vunpack.c.h.b16 %v1389
  %v1592 = vunpack.c.l.b16 %v1390
  %v1593 = vunpack.c.h.b16 %v1390
  %v1594 = vunpack.c.l.b16 %v1391
  %v1595 = vunpack.c.h.b16 %v1391
  %v1596 = vpack.c.b16 %v1470, %v1468
  %v1597 = vpack.c.b16 %v1471, %v1469
  %v1598 = vpack.c.b16 %v1474, %v1472
  %v1599 = vpack.c.b16 %v1475, %v1473
  %v1600 = vpack.c.b16 %v1478, %v1476
  %v1601 = vpack.c.b16 %v1479, %v1477
  %v1602 = vpack.c.b16 %v1482, %v1480
  %v1603 = vpack.c.b16 %v1483, %v1481
  %v1604 = vpack.c.b16 %v1486, %v1484
  %v1605 = vpack.c.b16 %v1487, %v1485
  %v1606 = vpack.c.b16 %v1490, %v1488
  %v1607 = vpack.c.b16 %v1491, %v1489
  %v1608 = vpack.c.b16 %v1494, %v1492
  %v1609 = vpack.c.b16 %v1495, %v1493
  %v1610 = vpack.c.b16 %v1498, %v1496
  %v1611 = vpack.c.b16 %v1499, %v1497
  %v1612 = vpack.c.b16 %v1502, %v1500
  %v1613 = vpack.c.b16 %v1503, %v1501
  %v1614 = vpack.c.b16 %v1506, %v1504
  %v1615 = vpack.c.b16 %v1507, %v1505
  %v1616 = vpack.c.b16 %v1510, %v1508
  %v1617 = vpack.c.b16 %v1511, %v1509
  %v1618 = vpack.c.b16 %v1514, %v1512
  %v1619 = vpack.c.b16 %v1515, %v1513
  %v1620 = vpack.c.b16 %v1518, %v1516
  %v1621 = vpack.c.b16 %v1519, %v1517
  %v1622 = vpack.c.b16 %v1522, %v1520
  %v1623 = vpack.c.b16 %v1523, %v1521
  %v1624 = vpack.c.b16 %v1526, %v1524
  %v1625 = vpack.c.b16 %v1527, %v1525
  %v1626 = vpack.c.b16 %v1530, %v1528
  %v1627 = vpack.c.b16 %v1531, %v1529
  %v1628 = vpack.c.b16 %v1534, %v1532
  %v1629 = vpack.c.b16 %v1535, %v1533
  %v1630 = vpack.c.b16 %v1538, %v1536
  %v1631 = vpack.c.b16 %v1539, %v1537
  %v1632 = vpack.c.b16 %v1542, %v1540
  %v1633 = vpack.c.b16 %v1543, %v1541
  %v1634 = vpack.c.b16 %v1546, %v1544
  %v1635 = vpack.c.b16 %v1547, %v1545
  %v1636 = vpack.c.b16 %v1550, %v1548
  %v1637 = vpack.c.b16 %v1551, %v1549
  %v1638 = vpack.c.b16 %v1554, %v1552
  %v1639 = vpack.c.b16 %v1555, %v1553
  %v1640 = vpack.c.b16 %v1558, %v1556
  %v1641 = vpack.c.b16 %v1559, %v1557
  %v1642 = vpack.c.b16 %v1562, %v1560
  %v1643 = vpack.c.b16 %v1563, %v1561
  %v1644 = vpack.c.b16 %v1566, %v1564
  %v1645 = vpack.c.b16 %v1567, %v1565
  %v1646 = vpack.c.b16 %v1570, %v1568
  %v1647 = vpack.c.b16 %v1571, %v1569
  %v1648 = vpack.c.b16 %v1574, %v1572
  %v1649 = vpack.c.b16 %v1575, %v1573
  %v1650 = vpack.c.b16 %v1578, %v1576
  %v1651 = vpack.c.b16 %v1579, %v1577
  %v1652 = vpack.c.b16 %v1582, %v1580
  %v1653 = vpack.c.b16 %v1583, %v1581
  %v1654 = vpack.c.b16 %v1586, %v1584
  %v1655 = vpack.c.b16 %v1587, %v1585
  %v1656 = vpack.c.b16 %v1590, %v1588
  %v1657 = vpack.c.b16 %v1591, %v1589
  %v1658 = vpack.c.b16 %v1594, %v1592
  %v1659 = vpack.c.b16 %v1595, %v1593
  %1724 = vmatprep.subr.bf16.mxu0 %v1597
  %1725 = vmatpush1.bf16.msra.mxu0 %v1596
  %1726 = vmatprep.subr.bf16.mxu0 %v1599
  %1727 = vmatpush1.bf16.msra.mxu0 %v1598
  %1728 = vmatprep.subr.bf16.mxu0 %v1601
  %1729 = vmatpush1.bf16.msra.mxu0 %v1600
  %1730 = vmatprep.subr.bf16.mxu0 %v1603
  %1731 = vmatpush1.bf16.msra.mxu0 %v1602
  %1732 = vmatprep.subr.bf16.mxu0 %v1605
  %1733 = vmatpush1.bf16.msra.mxu0 %v1604
  %1734 = vmatprep.subr.bf16.mxu0 %v1607
  %1735 = vmatpush1.bf16.msra.mxu0 %v1606
  %1736 = vmatprep.subr.bf16.mxu0 %v1609
  %1737 = vmatpush1.bf16.msra.mxu0 %v1608
  %1738 = vmatprep.subr.bf16.mxu0 %v1611
  %1739 = vmatpush1.bf16.msra.mxu0 %v1610
  %1740 = vmatprep.subr.bf16.mxu0 %v1613
  %1741 = vmatpush1.bf16.msra.mxu0 %v1612
  %1742 = vmatprep.subr.bf16.mxu0 %v1615
  %1743 = vmatpush1.bf16.msra.mxu0 %v1614
  %1744 = vmatprep.subr.bf16.mxu0 %v1617
  %1745 = vmatpush1.bf16.msra.mxu0 %v1616
  %1746 = vmatprep.subr.bf16.mxu0 %v1619
  %1747 = vmatpush1.bf16.msra.mxu0 %v1618
  %1748 = vmatprep.subr.bf16.mxu0 %v1621
  %1749 = vmatpush1.bf16.msra.mxu0 %v1620
  %1750 = vmatprep.subr.bf16.mxu0 %v1623
  %1751 = vmatpush1.bf16.msra.mxu0 %v1622
  %1752 = vmatprep.subr.bf16.mxu0 %v1625
  %1753 = vmatpush1.bf16.msra.mxu0 %v1624
  %1754 = vmatprep.subr.bf16.mxu0 %v1627
  %1755 = vmatpush1.bf16.msra.mxu0 %v1626
  %1756 = vmatprep.mubr.bf16.mxu0 %v1325
  %1757 = vmatmul.mubr.bf16.gmra.mrb[0].mxu0 %v1324
  %v1758 = vpop.f32.mrb[0].mxu0
  %v1759 = vadd.f32 %v1397, %v1758
  %v1760 = vpop.f32.mrb[0].mxu0
  %v1761 = vadd.f32 %v1401, %v1760
  %v1762 = vpop.f32.mrb[0].mxu0
  %v1763 = vpop.f32.mrb[0].mxu0
  %1764 = vdwg.mxu0
  %1765 = vmatprep.subr.bf16.mxu0 %v1629
  %1766 = vmatpush1.bf16.msra.mxu0 %v1628
  %1767 = vmatprep.subr.bf16.mxu0 %v1631
  %1768 = vmatpush1.bf16.msra.mxu0 %v1630
  %1769 = vmatprep.subr.bf16.mxu0 %v1633
  %1770 = vmatpush1.bf16.msra.mxu0 %v1632
  %1771 = vmatprep.subr.bf16.mxu0 %v1635
  %1772 = vmatpush1.bf16.msra.mxu0 %v1634
  %1773 = vmatprep.subr.bf16.mxu0 %v1637
  %1774 = vmatpush1.bf16.msra.mxu0 %v1636
  %1775 = vmatprep.subr.bf16.mxu0 %v1639
  %1776 = vmatpush1.bf16.msra.mxu0 %v1638
  %1777 = vmatprep.subr.bf16.mxu0 %v1641
  %1778 = vmatpush1.bf16.msra.mxu0 %v1640
  %1779 = vmatprep.subr.bf16.mxu0 %v1643
  %1780 = vmatpush1.bf16.msra.mxu0 %v1642
  %1781 = vmatprep.subr.bf16.mxu0 %v1645
  %1782 = vmatpush1.bf16.msra.mxu0 %v1644
  %1783 = vmatprep.subr.bf16.mxu0 %v1647
  %1784 = vmatpush1.bf16.msra.mxu0 %v1646
  %1785 = vmatprep.subr.bf16.mxu0 %v1649
  %1786 = vmatpush1.bf16.msra.mxu0 %v1648
  %1787 = vmatprep.subr.bf16.mxu0 %v1651
  %1788 = vmatpush1.bf16.msra.mxu0 %v1650
  %1789 = vmatprep.subr.bf16.mxu0 %v1653
  %1790 = vmatpush1.bf16.msra.mxu0 %v1652
  %1791 = vmatprep.subr.bf16.mxu0 %v1655
  %1792 = vmatpush1.bf16.msra.mxu0 %v1654
  %1793 = vmatprep.subr.bf16.mxu0 %v1657
  %1794 = vmatpush1.bf16.msra.mxu0 %v1656
  %1795 = vmatprep.subr.bf16.mxu0 %v1659
  %1796 = vmatpush1.bf16.msra.mxu0 %v1658
  %1797 = vmatprep.mubr.bf16.mxu0 %v1327
  %1798 = vmatmul.mubr.bf16.gmra.mrb[0].mxu0 %v1326
  %v1799 = vpop.f32.mrb[0].mxu0
  %v1800 = vadd.f32 %v1759, %v1799
  %v1801 = vpop.f32.mrb[0].mxu0
  %v1802 = vadd.f32 %v1761, %v1801
  %v1803 = vpop.f32.mrb[0].mxu0
  %v1804 = vpop.f32.mrb[0].mxu0
  %1805 = vdwg.mxu0
  %v1806 = vtanh.pop %v1800
  %v1807 = vtanh.pop %v1802
  %v1810 = vcombine.low %v1806, %v1807
  %1812 = vst [vmem:[%s8] sm:$0xff] %v1810
  // Predicated region
  $region34: #{_lambda_.1} parent=0 // pred_check
    _
  $region35: #{_lambda_.1} parent=0 // pred_check_branch
    %1814 = sbr.rel (0) target = $region37
  $region36: #{_lambda_.1} parent=0 // pred_region
    _
  $region37: #{_lambda_.1} parent=0 // pred_fallthru
    _
  // Predicated region
  $region38: #{_lambda_.1} parent=0 // pred_check
    _
  $region39: #{_lambda_.1} parent=0 // pred_check_branch
    %1816 = sbr.rel (0) target = $region41
  $region40: #{_lambda_.1} parent=0 // pred_region
    _
  $region41: #{_lambda_.1} parent=0 // pred_fallthru
    _

</llo_original>
